<compile_context>
chip_gen: v6e
topology: v6e:2x2x1
jax: 0.10.0
libtpu: 0.0.40
codegen_flags: <defaults>
</compile_context>

<pallas_src>
import functools

import numpy as np
import jax
import jax.numpy as jnp
from jax.experimental import pallas as pl
from jax.experimental.pallas import tpu as pltpu


_RP = 1   # row offset of the interior inside the padded scratch
_CP = 3   # column offset of the interior inside the padded scratch


def _wavelet_kernel(params_ref, a_ref, b_ref, oa_ref, ob_ref, pad_ref, *, rev):
    """Fused lifting-wavelet kernel on a (TN, h2, W) block of planes.

    forward (rev=False):
      a_ref/b_ref  : even / odd rows of the input planes           (TN, h2, W)
      oa_ref       : column-interleaved [LL | HL] result           (TN, h2, W)
      ob_ref       : column-interleaved [LH | HH] result           (TN, h2, W)
    reverse (rev=True):
      a_ref/b_ref  : column-interleaved [LL|HL] / [LH|HH] inputs
      oa_ref/ob_ref: even / odd rows of the reconstructed planes
    params layout (SMEM float32[20]): [Wp(9), Wu(9), bP, bU]
    """
    tn, h2, W = a_ref.shape

    # Hoist all 20 SMEM scalars out of the tap loops.
    wp = [[params_ref[3 * r + c] for c in range(3)] for r in range(3)]
    wu = [[params_ref[9 + 3 * r + c] for c in range(3)] for r in range(3)]
    wpT = [[wp[c][r] for c in range(3)] for r in range(3)]
    wuT = [[wu[c][r] for c in range(3)] for r in range(3)]
    bp = params_ref[18]
    bu = params_ref[19]

    # Zero the padded scratch once; interior rewrites never touch the padding.
    pad_ref[...] = jnp.zeros_like(pad_ref)

    def conv(x, w, bias, col_step, col_shift):
        """3x3 lifting conv as 9 static slices of the zero-padded scratch.

        col_step=1, col_shift=0   : plain 3x3 conv, zero padding 1 (row pass).
        col_step=2, col_shift=+-1 : dilation-2 column taps shifted to the other
                                    column parity (column pass on interleaved
                                    data with transposed weights).
        """
        pad_ref[:, _RP:_RP + h2, _CP:_CP + W] = x
        acc = None
        for di in (-1, 0, 1):
            r0 = _RP + di
            for dj in (-1, 0, 1):
                c0 = _CP + col_step * dj + col_shift
                tap = w[di + 1][dj + 1] * pad_ref[:, r0:r0 + h2, c0:c0 + W]
                acc = tap if acc is None else acc + tap
        return acc + bias

    cols = jax.lax.broadcasted_iota(jnp.int32, (tn, h2, W), 2)
    col_even = (cols % 2) == 0

    if not rev:
        l0 = a_ref[...].astype(jnp.float32)       # even input rows
        h0 = b_ref[...].astype(jnp.float32)       # odd input rows
        # Row lifting:  H = H - (P(L)+bp) ; L = L + (U(H)+bu)
        h1 = h0 - conv(l0, wp, bp, 1, 0)
        l1 = l0 + conv(h1, wu, bu, 1, 0)
        # Column lifting on L branch (interleaved, transposed weights):
        lb = l1 - conv(l1, wpT, bp, 2, -1)        # HL, valid at odd columns
        la = l1 + conv(lb, wuT, bu, 2, +1)        # LL, valid at even columns
        oa_ref[...] = jnp.where(col_even, la, lb)
        # Column lifting on H branch:
        hb = h1 - conv(h1, wpT, bp, 2, -1)        # HH at odd columns
        ha = h1 + conv(hb, wuT, bu, 2, +1)        # LH at even columns
        ob_ref[...] = jnp.where(col_even, ha, hb)
    else:
        lc = a_ref[...].astype(jnp.float32)       # [LL | HL] interleaved
        hc = b_ref[...].astype(jnp.float32)       # [LH | HH] interleaved
        # Inverse column lifting:
        la = lc - conv(lc, wuT, bu, 2, +1)        # LL_in at even columns
        lb = lc + conv(la, wpT, bp, 2, -1)        # HL_in at odd columns
        l1 = jnp.where(col_even, la, lb)
        ha = hc - conv(hc, wuT, bu, 2, +1)
        hb = hc + conv(ha, wpT, bp, 2, -1)
        h1 = jnp.where(col_even, ha, hb)
        # Inverse row lifting:
        l0 = l1 - conv(h1, wu, bu, 1, 0)
        h0 = h1 + conv(l0, wp, bp, 1, 0)
        oa_ref[...] = l0
        ob_ref[...] = h0


def _choose_tn(n, h2, w):
    """Planes per grid step: as many as fit comfortably in VMEM, >= 2 steps."""
    plane_bytes = h2 * w * 4
    budget = 6 * 1024 * 1024                     # conservative for v7x (64 MiB)
    cap = max(1, budget // (plane_bytes * 16))   # ~4 I/O arrays x2 buf + temps
    if n >= 2:
        cap = min(cap, (n + 1) // 2)             # >= 2 parallel steps (2 TCs)
    tn = 1
    for d in range(1, n + 1):
        if n % d == 0 and d <= cap:
            tn = d
    return tn


def _lifting_call(params, a, b, rev):
    n, h2, w = a.shape
    tn = _choose_tn(n, h2, w)
    grid = (n // tn,)
    blk = pl.BlockSpec((tn, h2, w), lambda i: (i, 0, 0))
    kernel = functools.partial(_wavelet_kernel, rev=rev)
    flops = int(n * h2 * w * 108)                # 6 convs x 9 taps x mul+add
    bytes_acc = int(4 * n * h2 * w * 4)          # 2 inputs + 2 outputs, f32
    return pl.pallas_call(
        kernel,
        out_shape=(jax.ShapeDtypeStruct((n, h2, w), jnp.float32),
                   jax.ShapeDtypeStruct((n, h2, w), jnp.float32)),
        grid=grid,
        in_specs=[pl.BlockSpec(memory_space=pltpu.MemorySpace.SMEM), blk, blk],
        out_specs=(blk, blk),
        scratch_shapes=[pltpu.VMEM((tn, h2 + 2, w + 6), jnp.float32)],
        compiler_params=pltpu.CompilerParams(
            dimension_semantics=("parallel",),
            vmem_limit_bytes=32 * 1024 * 1024),
        cost_estimate=pl.CostEstimate(flops=flops, transcendentals=0,
                                      bytes_accessed=bytes_acc),
    )(params, a, b)


def learn_wavelet_forward(x, params, rev=False):
    """JAX/Pallas equivalent of learn_wavelet.forward (NCHW float32)."""
    if not rev:
        B, C, H, W = x.shape
        n, h2, w2 = B * C, H // 2, W // 2
        x4 = x.reshape(n, h2, 2, W)                  # channel2batch + row split
        l0 = x4[:, :, 0, :]
        h0 = x4[:, :, 1, :]
        lc, hc = _lifting_call(params, l0, h0, rev=False)
        lr = lc.reshape(n, h2, w2, 2)                # de-interleave columns
        hr = hc.reshape(n, h2, w2, 2)

        def b2c(t):
            return t.reshape(B, C, h2, w2)           # batch2channel
        return jnp.concatenate(
            [b2c(lr[..., 0]), b2c(lr[..., 1]),       # LL, HL
             b2c(hr[..., 0]), b2c(hr[..., 1])],      # LH, HH
            axis=1)
    else:
        B, C4, h2, w2 = x.shape
        C = C4 // 4
        n, H, W = B * C, 2 * h2, 2 * w2
        LL, HL, LH, HH = jnp.split(x, 4, axis=1)

        def c2b(t):
            return t.reshape(n, h2, w2)              # channel2batch
        lc = jnp.stack([c2b(LL), c2b(HL)], axis=-1).reshape(n, h2, W)
        hc = jnp.stack([c2b(LH), c2b(HH)], axis=-1).reshape(n, h2, W)
        l0, h0 = _lifting_call(params, lc, hc, rev=True)
        xr = jnp.stack([l0, h0], axis=2).reshape(n, H, W)   # re-interleave rows
        return xr.reshape(B, C, H, W)                # batch2channel


# ----------------------------------------------------------------------------
# Pure-JAX reference that mirrors the PyTorch control flow (for cross-check).
# ----------------------------------------------------------------------------
def _conv3x3_ref(x, w, b):
    xp = jnp.pad(x, ((0, 0), (1, 1), (1, 1)))
    r, c = x.shape[1], x.shape[2]
    acc = jnp.zeros_like(x) + b
    for di in range(3):
        for dj in range(3):
            acc = acc + w[di, dj] * xp[:, di:di + r, dj:dj + c]
    return acc


def _lifting_ref(L, H, params):
    Wp = params[:9].reshape(3, 3)
    Wu = params[9:18].reshape(3, 3)
    bp, bu = params[18], params[19]
    Hn = H - _conv3x3_ref(L, Wp, bp)
    Ln = L + _conv3x3_ref(Hn, Wu, bu)
    return Ln, Hn


def learn_wavelet_ref(x, params):
    B, C, Hh, Ww = x.shape
    xb = x.reshape(B * C, Hh, Ww)
    L, Hb = xb[:, 0::2, :], xb[:, 1::2, :]
    L, Hb = _lifting_ref(L, Hb, params)
    Lt = jnp.swapaxes(L, 1, 2)
    LL, HL = _lifting_ref(Lt[:, 0::2, :], Lt[:, 1::2, :], params)
    LL, HL = jnp.swapaxes(LL, 1, 2), jnp.swapaxes(HL, 1, 2)
    Ht = jnp.swapaxes(Hb, 1, 2)
    LH, HH = _lifting_ref(Ht[:, 0::2, :], Ht[:, 1::2, :], params)
    LH, HH = jnp.swapaxes(LH, 1, 2), jnp.swapaxes(HH, 1, 2)

    def b2c(t):
        return t.reshape(B, C, t.shape[1], t.shape[2])
    return jnp.concatenate([b2c(LL), b2c(HL), b2c(LH), b2c(HH)], axis=1)


if __name__ == "__main__":
    key = jax.random.PRNGKey(0)
    kx, kp, ku = jax.random.split(key, 3)
    # Input: NCHW, batch=2, channels=4, spatial=16x16
    x = jax.random.normal(kx, (2, 4, 16, 16), jnp.float32)

    # Deterministic lifting parameters: Wp (3x3), Wu (3x3), biases bP, bU.
    Wp = jax.random.normal(kp, (3, 3), jnp.float32) * 0.1
    Wu = jax.random.normal(ku, (3, 3), jnp.float32) * 0.1
    params = jnp.concatenate(
        [Wp.ravel(), Wu.ravel(), jnp.array([0.01, -0.02], jnp.float32)])

    fwd = jax.jit(functools.partial(learn_wavelet_forward, rev=False))
    inv = jax.jit(functools.partial(learn_wavelet_forward, rev=True))

    # Forward (rev=False): (2, 4, 16, 16) -> (2, 16, 8, 8)
    y = jax.block_until_ready(fwd(x, params))
    assert y.shape == (2, 16, 8, 8), y.shape

    # Cross-check against a pure-JAX mirror of the PyTorch control flow.
    y_ref = learn_wavelet_ref(x, params)
    np.testing.assert_allclose(np.asarray(y), np.asarray(y_ref),
                               rtol=1e-4, atol=2e-4)

    # Invertibility check: rev=True reconstructs the input.
    x_rec = jax.block_until_ready(inv(y, params))
    assert x_rec.shape == x.shape
    np.testing.assert_allclose(np.asarray(x_rec), np.asarray(x),
                               rtol=1e-4, atol=2e-4)

    print("KERNEL_OK")
</pallas_src>

<mosaic_0001>
module attributes {stable_mosaic.version = 11 : i64} {
  func.func @_wavelet_kernel(%arg0: i32, %arg1: memref<20xf32, #tpu.memory_space<smem>>, %arg2: memref<4x8x16xf32, #tpu.memory_space<vmem>>, %arg3: memref<4x8x16xf32, #tpu.memory_space<vmem>>, %arg4: memref<4x8x16xf32, #tpu.memory_space<vmem>>, %arg5: memref<4x8x16xf32, #tpu.memory_space<vmem>>, %arg6: memref<4x10x22xf32, #tpu.memory_space<vmem>>) attributes {dimension_semantics = [#tpu.dimension_semantics<parallel>], iteration_bounds = array<i64: 2>, scalar_prefetch = 0 : i64, scratch_operands = 1 : i64, tpu.core_type = #tpu.core_type<tc>, window_params = [{transform_indices = @transform_0, window_bounds = array<i64: 20>}, {transform_indices = @transform_1, window_bounds = array<i64: 4, 8, 16>}, {transform_indices = @transform_2, window_bounds = array<i64: 4, 8, 16>}, {transform_indices = @transform_3, window_bounds = array<i64: 4, 8, 16>}, {transform_indices = @transform_4, window_bounds = array<i64: 4, 8, 16>}]} {
    %c0 = arith.constant 0 : index
    %0 = memref.load %arg1[%c0] : memref<20xf32, #tpu.memory_space<smem>>
    %c1 = arith.constant 1 : index
    %1 = memref.load %arg1[%c1] : memref<20xf32, #tpu.memory_space<smem>>
    %c2 = arith.constant 2 : index
    %2 = memref.load %arg1[%c2] : memref<20xf32, #tpu.memory_space<smem>>
    %c3 = arith.constant 3 : index
    %3 = memref.load %arg1[%c3] : memref<20xf32, #tpu.memory_space<smem>>
    %c4 = arith.constant 4 : index
    %4 = memref.load %arg1[%c4] : memref<20xf32, #tpu.memory_space<smem>>
    %c5 = arith.constant 5 : index
    %5 = memref.load %arg1[%c5] : memref<20xf32, #tpu.memory_space<smem>>
    %c6 = arith.constant 6 : index
    %6 = memref.load %arg1[%c6] : memref<20xf32, #tpu.memory_space<smem>>
    %c7 = arith.constant 7 : index
    %7 = memref.load %arg1[%c7] : memref<20xf32, #tpu.memory_space<smem>>
    %c8 = arith.constant 8 : index
    %8 = memref.load %arg1[%c8] : memref<20xf32, #tpu.memory_space<smem>>
    %c9 = arith.constant 9 : index
    %9 = memref.load %arg1[%c9] : memref<20xf32, #tpu.memory_space<smem>>
    %c10 = arith.constant 10 : index
    %10 = memref.load %arg1[%c10] : memref<20xf32, #tpu.memory_space<smem>>
    %c11 = arith.constant 11 : index
    %11 = memref.load %arg1[%c11] : memref<20xf32, #tpu.memory_space<smem>>
    %c12 = arith.constant 12 : index
    %12 = memref.load %arg1[%c12] : memref<20xf32, #tpu.memory_space<smem>>
    %c13 = arith.constant 13 : index
    %13 = memref.load %arg1[%c13] : memref<20xf32, #tpu.memory_space<smem>>
    %c14 = arith.constant 14 : index
    %14 = memref.load %arg1[%c14] : memref<20xf32, #tpu.memory_space<smem>>
    %c15 = arith.constant 15 : index
    %15 = memref.load %arg1[%c15] : memref<20xf32, #tpu.memory_space<smem>>
    %c16 = arith.constant 16 : index
    %16 = memref.load %arg1[%c16] : memref<20xf32, #tpu.memory_space<smem>>
    %c17 = arith.constant 17 : index
    %17 = memref.load %arg1[%c17] : memref<20xf32, #tpu.memory_space<smem>>
    %c18 = arith.constant 18 : index
    %18 = memref.load %arg1[%c18] : memref<20xf32, #tpu.memory_space<smem>>
    %c19 = arith.constant 19 : index
    %19 = memref.load %arg1[%c19] : memref<20xf32, #tpu.memory_space<smem>>
    %cst = arith.constant 0.000000e+00 : f32
    %20 = vector.broadcast %cst : f32 to vector<4x10x22xf32>
    %c0_0 = arith.constant 0 : index
    %c0_1 = arith.constant 0 : index
    %c0_2 = arith.constant 0 : index
    %21 = vector.load %arg6[%c0_0, %c0_1, %c0_2] : memref<4x10x22xf32, #tpu.memory_space<vmem>>, vector<4x10x22xf32>
    tpu.vector_store %arg6[%c0_0, %c0_1, %c0_2], %20 {strides = array<i32>} : memref<4x10x22xf32, #tpu.memory_space<vmem>>, vector<4x10x22xf32>,
    %22 = tpu.iota {dimensions = array<i32: 2>} : vector<4x8x16xi32>
    %c2_i32 = arith.constant 2 : i32
    %c0_i32 = arith.constant 0 : i32
    %23 = arith.cmpi eq, %c2_i32, %c0_i32 : i32
    %c1_i32 = arith.constant 1 : i32
    %24 = arith.select %23, %c1_i32, %c2_i32 : i32
    %25 = vector.broadcast %24 : i32 to vector<4x8x16xi32>
    %26 = arith.remsi %22, %25 : vector<4x8x16xi32>
    %c0_i32_3 = arith.constant 0 : i32
    %27 = vector.broadcast %c0_i32_3 : i32 to vector<4x8x16xi32>
    %28 = arith.cmpi ne, %26, %27 : vector<4x8x16xi32>
    %c0_i32_4 = arith.constant 0 : i32
    %29 = vector.broadcast %c0_i32_4 : i32 to vector<4x8x16xi32>
    %30 = arith.cmpi slt, %26, %29 : vector<4x8x16xi32>
    %c0_i32_5 = arith.constant 0 : i32
    %31 = arith.cmpi slt, %24, %c0_i32_5 : i32
    %32 = vector.broadcast %31 : i1 to vector<4x8x16xi1>
    %33 = vector.broadcast %32 : vector<4x8x16xi1> to vector<4x8x16xi1>
    %34 = arith.xori %30, %33 : vector<4x8x16xi1>
    %35 = arith.andi %34, %28 : vector<4x8x16xi1>
    %36 = vector.broadcast %24 : i32 to vector<4x8x16xi32>
    %37 = arith.addi %26, %36 : vector<4x8x16xi32>
    %38 = arith.select %35, %37, %26 : vector<4x8x16xi1>, vector<4x8x16xi32>
    %c0_i32_6 = arith.constant 0 : i32
    %39 = vector.broadcast %c0_i32_6 : i32 to vector<4x8x16xi32>
    %40 = arith.cmpi eq, %38, %39 : vector<4x8x16xi32>
    %c0_7 = arith.constant 0 : index
    %c0_8 = arith.constant 0 : index
    %c0_9 = arith.constant 0 : index
    %41 = vector.load %arg2[%c0_7, %c0_8, %c0_9] : memref<4x8x16xf32, #tpu.memory_space<vmem>>, vector<4x8x16xf32>
    %c0_10 = arith.constant 0 : index
    %c0_11 = arith.constant 0 : index
    %c0_12 = arith.constant 0 : index
    %42 = vector.load %arg3[%c0_10, %c0_11, %c0_12] : memref<4x8x16xf32, #tpu.memory_space<vmem>>, vector<4x8x16xf32>
    %c0_13 = arith.constant 0 : index
    %c1_14 = arith.constant 1 : index
    %c3_15 = arith.constant 3 : index
    %43 = vector.load %arg6[%c0_13, %c1_14, %c3_15] : memref<4x10x22xf32, #tpu.memory_space<vmem>>, vector<4x8x16xf32>
    tpu.vector_store %arg6[%c0_13, %c1_14, %c3_15], %41 {strides = array<i32>} : memref<4x10x22xf32, #tpu.memory_space<vmem>>, vector<4x8x16xf32>,
    %c0_16 = arith.constant 0 : index
    %c0_17 = arith.constant 0 : index
    %c2_18 = arith.constant 2 : index
    %44 = vector.load %arg6[%c0_16, %c0_17, %c2_18] : memref<4x10x22xf32, #tpu.memory_space<vmem>>, vector<4x8x16xf32>
    %45 = vector.broadcast %0 : f32 to vector<4x8x16xf32>
    %46 = arith.mulf %45, %44 : vector<4x8x16xf32>
    %c0_19 = arith.constant 0 : index
    %c0_20 = arith.constant 0 : index
    %c3_21 = arith.constant 3 : index
    %47 = vector.load %arg6[%c0_19, %c0_20, %c3_21] : memref<4x10x22xf32, #tpu.memory_space<vmem>>, vector<4x8x16xf32>
    %48 = vector.broadcast %1 : f32 to vector<4x8x16xf32>
    %49 = arith.mulf %48, %47 : vector<4x8x16xf32>
    %50 = arith.addf %46, %49 : vector<4x8x16xf32>
    %c0_22 = arith.constant 0 : index
    %c0_23 = arith.constant 0 : index
    %c4_24 = arith.constant 4 : index
    %51 = vector.load %arg6[%c0_22, %c0_23, %c4_24] : memref<4x10x22xf32, #tpu.memory_space<vmem>>, vector<4x8x16xf32>
    %52 = vector.broadcast %2 : f32 to vector<4x8x16xf32>
    %53 = arith.mulf %52, %51 : vector<4x8x16xf32>
    %54 = arith.addf %50, %53 : vector<4x8x16xf32>
    %c0_25 = arith.constant 0 : index
    %c1_26 = arith.constant 1 : index
    %c2_27 = arith.constant 2 : index
    %55 = vector.load %arg6[%c0_25, %c1_26, %c2_27] : memref<4x10x22xf32, #tpu.memory_space<vmem>>, vector<4x8x16xf32>
    %56 = vector.broadcast %3 : f32 to vector<4x8x16xf32>
    %57 = arith.mulf %56, %55 : vector<4x8x16xf32>
    %58 = arith.addf %54, %57 : vector<4x8x16xf32>
    %c0_28 = arith.constant 0 : index
    %c1_29 = arith.constant 1 : index
    %c3_30 = arith.constant 3 : index
    %59 = vector.load %arg6[%c0_28, %c1_29, %c3_30] : memref<4x10x22xf32, #tpu.memory_space<vmem>>, vector<4x8x16xf32>
    %60 = vector.broadcast %4 : f32 to vector<4x8x16xf32>
    %61 = arith.mulf %60, %59 : vector<4x8x16xf32>
    %62 = arith.addf %58, %61 : vector<4x8x16xf32>
    %c0_31 = arith.constant 0 : index
    %c1_32 = arith.constant 1 : index
    %c4_33 = arith.constant 4 : index
    %63 = vector.load %arg6[%c0_31, %c1_32, %c4_33] : memref<4x10x22xf32, #tpu.memory_space<vmem>>, vector<4x8x16xf32>
    %64 = vector.broadcast %5 : f32 to vector<4x8x16xf32>
    %65 = arith.mulf %64, %63 : vector<4x8x16xf32>
    %66 = arith.addf %62, %65 : vector<4x8x16xf32>
    %c0_34 = arith.constant 0 : index
    %c2_35 = arith.constant 2 : index
    %c2_36 = arith.constant 2 : index
    %67 = vector.load %arg6[%c0_34, %c2_35, %c2_36] : memref<4x10x22xf32, #tpu.memory_space<vmem>>, vector<4x8x16xf32>
    %68 = vector.broadcast %6 : f32 to vector<4x8x16xf32>
    %69 = arith.mulf %68, %67 : vector<4x8x16xf32>
    %70 = arith.addf %66, %69 : vector<4x8x16xf32>
    %c0_37 = arith.constant 0 : index
    %c2_38 = arith.constant 2 : index
    %c3_39 = arith.constant 3 : index
    %71 = vector.load %arg6[%c0_37, %c2_38, %c3_39] : memref<4x10x22xf32, #tpu.memory_space<vmem>>, vector<4x8x16xf32>
    %72 = vector.broadcast %7 : f32 to vector<4x8x16xf32>
    %73 = arith.mulf %72, %71 : vector<4x8x16xf32>
    %74 = arith.addf %70, %73 : vector<4x8x16xf32>
    %c0_40 = arith.constant 0 : index
    %c2_41 = arith.constant 2 : index
    %c4_42 = arith.constant 4 : index
    %75 = vector.load %arg6[%c0_40, %c2_41, %c4_42] : memref<4x10x22xf32, #tpu.memory_space<vmem>>, vector<4x8x16xf32>
    %76 = vector.broadcast %8 : f32 to vector<4x8x16xf32>
    %77 = arith.mulf %76, %75 : vector<4x8x16xf32>
    %78 = arith.addf %74, %77 : vector<4x8x16xf32>
    %79 = vector.broadcast %18 : f32 to vector<4x8x16xf32>
    %80 = arith.addf %78, %79 : vector<4x8x16xf32>
    %81 = arith.subf %42, %80 : vector<4x8x16xf32>
    %c0_43 = arith.constant 0 : index
    %c1_44 = arith.constant 1 : index
    %c3_45 = arith.constant 3 : index
    %82 = vector.load %arg6[%c0_43, %c1_44, %c3_45] : memref<4x10x22xf32, #tpu.memory_space<vmem>>, vector<4x8x16xf32>
    tpu.vector_store %arg6[%c0_43, %c1_44, %c3_45], %81 {strides = array<i32>} : memref<4x10x22xf32, #tpu.memory_space<vmem>>, vector<4x8x16xf32>,
    %c0_46 = arith.constant 0 : index
    %c0_47 = arith.constant 0 : index
    %c2_48 = arith.constant 2 : index
    %83 = vector.load %arg6[%c0_46, %c0_47, %c2_48] : memref<4x10x22xf32, #tpu.memory_space<vmem>>, vector<4x8x16xf32>
    %84 = vector.broadcast %9 : f32 to vector<4x8x16xf32>
    %85 = arith.mulf %84, %83 : vector<4x8x16xf32>
    %c0_49 = arith.constant 0 : index
    %c0_50 = arith.constant 0 : index
    %c3_51 = arith.constant 3 : index
    %86 = vector.load %arg6[%c0_49, %c0_50, %c3_51] : memref<4x10x22xf32, #tpu.memory_space<vmem>>, vector<4x8x16xf32>
    %87 = vector.broadcast %10 : f32 to vector<4x8x16xf32>
    %88 = arith.mulf %87, %86 : vector<4x8x16xf32>
    %89 = arith.addf %85, %88 : vector<4x8x16xf32>
    %c0_52 = arith.constant 0 : index
    %c0_53 = arith.constant 0 : index
    %c4_54 = arith.constant 4 : index
    %90 = vector.load %arg6[%c0_52, %c0_53, %c4_54] : memref<4x10x22xf32, #tpu.memory_space<vmem>>, vector<4x8x16xf32>
    %91 = vector.broadcast %11 : f32 to vector<4x8x16xf32>
    %92 = arith.mulf %91, %90 : vector<4x8x16xf32>
    %93 = arith.addf %89, %92 : vector<4x8x16xf32>
    %c0_55 = arith.constant 0 : index
    %c1_56 = arith.constant 1 : index
    %c2_57 = arith.constant 2 : index
    %94 = vector.load %arg6[%c0_55, %c1_56, %c2_57] : memref<4x10x22xf32, #tpu.memory_space<vmem>>, vector<4x8x16xf32>
    %95 = vector.broadcast %12 : f32 to vector<4x8x16xf32>
    %96 = arith.mulf %95, %94 : vector<4x8x16xf32>
    %97 = arith.addf %93, %96 : vector<4x8x16xf32>
    %c0_58 = arith.constant 0 : index
    %c1_59 = arith.constant 1 : index
    %c3_60 = arith.constant 3 : index
    %98 = vector.load %arg6[%c0_58, %c1_59, %c3_60] : memref<4x10x22xf32, #tpu.memory_space<vmem>>, vector<4x8x16xf32>
    %99 = vector.broadcast %13 : f32 to vector<4x8x16xf32>
    %100 = arith.mulf %99, %98 : vector<4x8x16xf32>
    %101 = arith.addf %97, %100 : vector<4x8x16xf32>
    %c0_61 = arith.constant 0 : index
    %c1_62 = arith.constant 1 : index
    %c4_63 = arith.constant 4 : index
    %102 = vector.load %arg6[%c0_61, %c1_62, %c4_63] : memref<4x10x22xf32, #tpu.memory_space<vmem>>, vector<4x8x16xf32>
    %103 = vector.broadcast %14 : f32 to vector<4x8x16xf32>
    %104 = arith.mulf %103, %102 : vector<4x8x16xf32>
    %105 = arith.addf %101, %104 : vector<4x8x16xf32>
    %c0_64 = arith.constant 0 : index
    %c2_65 = arith.constant 2 : index
    %c2_66 = arith.constant 2 : index
    %106 = vector.load %arg6[%c0_64, %c2_65, %c2_66] : memref<4x10x22xf32, #tpu.memory_space<vmem>>, vector<4x8x16xf32>
    %107 = vector.broadcast %15 : f32 to vector<4x8x16xf32>
    %108 = arith.mulf %107, %106 : vector<4x8x16xf32>
    %109 = arith.addf %105, %108 : vector<4x8x16xf32>
    %c0_67 = arith.constant 0 : index
    %c2_68 = arith.constant 2 : index
    %c3_69 = arith.constant 3 : index
    %110 = vector.load %arg6[%c0_67, %c2_68, %c3_69] : memref<4x10x22xf32, #tpu.memory_space<vmem>>, vector<4x8x16xf32>
    %111 = vector.broadcast %16 : f32 to vector<4x8x16xf32>
    %112 = arith.mulf %111, %110 : vector<4x8x16xf32>
    %113 = arith.addf %109, %112 : vector<4x8x16xf32>
    %c0_70 = arith.constant 0 : index
    %c2_71 = arith.constant 2 : index
    %c4_72 = arith.constant 4 : index
    %114 = vector.load %arg6[%c0_70, %c2_71, %c4_72] : memref<4x10x22xf32, #tpu.memory_space<vmem>>, vector<4x8x16xf32>
    %115 = vector.broadcast %17 : f32 to vector<4x8x16xf32>
    %116 = arith.mulf %115, %114 : vector<4x8x16xf32>
    %117 = arith.addf %113, %116 : vector<4x8x16xf32>
    %118 = vector.broadcast %19 : f32 to vector<4x8x16xf32>
    %119 = arith.addf %117, %118 : vector<4x8x16xf32>
    %120 = arith.addf %41, %119 : vector<4x8x16xf32>
    %c0_73 = arith.constant 0 : index
    %c1_74 = arith.constant 1 : index
    %c3_75 = arith.constant 3 : index
    %121 = vector.load %arg6[%c0_73, %c1_74, %c3_75] : memref<4x10x22xf32, #tpu.memory_space<vmem>>, vector<4x8x16xf32>
    tpu.vector_store %arg6[%c0_73, %c1_74, %c3_75], %120 {strides = array<i32>} : memref<4x10x22xf32, #tpu.memory_space<vmem>>, vector<4x8x16xf32>,
    %c0_76 = arith.constant 0 : index
    %c0_77 = arith.constant 0 : index
    %c0_78 = arith.constant 0 : index
    %122 = vector.load %arg6[%c0_76, %c0_77, %c0_78] : memref<4x10x22xf32, #tpu.memory_space<vmem>>, vector<4x8x16xf32>
    %123 = vector.broadcast %0 : f32 to vector<4x8x16xf32>
    %124 = arith.mulf %123, %122 : vector<4x8x16xf32>
    %c0_79 = arith.constant 0 : index
    %c0_80 = arith.constant 0 : index
    %c2_81 = arith.constant 2 : index
    %125 = vector.load %arg6[%c0_79, %c0_80, %c2_81] : memref<4x10x22xf32, #tpu.memory_space<vmem>>, vector<4x8x16xf32>
    %126 = vector.broadcast %3 : f32 to vector<4x8x16xf32>
    %127 = arith.mulf %126, %125 : vector<4x8x16xf32>
    %128 = arith.addf %124, %127 : vector<4x8x16xf32>
    %c0_82 = arith.constant 0 : index
    %c0_83 = arith.constant 0 : index
    %c4_84 = arith.constant 4 : index
    %129 = vector.load %arg6[%c0_82, %c0_83, %c4_84] : memref<4x10x22xf32, #tpu.memory_space<vmem>>, vector<4x8x16xf32>
    %130 = vector.broadcast %6 : f32 to vector<4x8x16xf32>
    %131 = arith.mulf %130, %129 : vector<4x8x16xf32>
    %132 = arith.addf %128, %131 : vector<4x8x16xf32>
    %c0_85 = arith.constant 0 : index
    %c1_86 = arith.constant 1 : index
    %c0_87 = arith.constant 0 : index
    %133 = vector.load %arg6[%c0_85, %c1_86, %c0_87] : memref<4x10x22xf32, #tpu.memory_space<vmem>>, vector<4x8x16xf32>
    %134 = vector.broadcast %1 : f32 to vector<4x8x16xf32>
    %135 = arith.mulf %134, %133 : vector<4x8x16xf32>
    %136 = arith.addf %132, %135 : vector<4x8x16xf32>
    %c0_88 = arith.constant 0 : index
    %c1_89 = arith.constant 1 : index
    %c2_90 = arith.constant 2 : index
    %137 = vector.load %arg6[%c0_88, %c1_89, %c2_90] : memref<4x10x22xf32, #tpu.memory_space<vmem>>, vector<4x8x16xf32>
    %138 = vector.broadcast %4 : f32 to vector<4x8x16xf32>
    %139 = arith.mulf %138, %137 : vector<4x8x16xf32>
    %140 = arith.addf %136, %139 : vector<4x8x16xf32>
    %c0_91 = arith.constant 0 : index
    %c1_92 = arith.constant 1 : index
    %c4_93 = arith.constant 4 : index
    %141 = vector.load %arg6[%c0_91, %c1_92, %c4_93] : memref<4x10x22xf32, #tpu.memory_space<vmem>>, vector<4x8x16xf32>
    %142 = vector.broadcast %7 : f32 to vector<4x8x16xf32>
    %143 = arith.mulf %142, %141 : vector<4x8x16xf32>
    %144 = arith.addf %140, %143 : vector<4x8x16xf32>
    %c0_94 = arith.constant 0 : index
    %c2_95 = arith.constant 2 : index
    %c0_96 = arith.constant 0 : index
    %145 = vector.load %arg6[%c0_94, %c2_95, %c0_96] : memref<4x10x22xf32, #tpu.memory_space<vmem>>, vector<4x8x16xf32>
    %146 = vector.broadcast %2 : f32 to vector<4x8x16xf32>
    %147 = arith.mulf %146, %145 : vector<4x8x16xf32>
    %148 = arith.addf %144, %147 : vector<4x8x16xf32>
    %c0_97 = arith.constant 0 : index
    %c2_98 = arith.constant 2 : index
    %c2_99 = arith.constant 2 : index
    %149 = vector.load %arg6[%c0_97, %c2_98, %c2_99] : memref<4x10x22xf32, #tpu.memory_space<vmem>>, vector<4x8x16xf32>
    %150 = vector.broadcast %5 : f32 to vector<4x8x16xf32>
    %151 = arith.mulf %150, %149 : vector<4x8x16xf32>
    %152 = arith.addf %148, %151 : vector<4x8x16xf32>
    %c0_100 = arith.constant 0 : index
    %c2_101 = arith.constant 2 : index
    %c4_102 = arith.constant 4 : index
    %153 = vector.load %arg6[%c0_100, %c2_101, %c4_102] : memref<4x10x22xf32, #tpu.memory_space<vmem>>, vector<4x8x16xf32>
    %154 = vector.broadcast %8 : f32 to vector<4x8x16xf32>
    %155 = arith.mulf %154, %153 : vector<4x8x16xf32>
    %156 = arith.addf %152, %155 : vector<4x8x16xf32>
    %157 = vector.broadcast %18 : f32 to vector<4x8x16xf32>
    %158 = arith.addf %156, %157 : vector<4x8x16xf32>
    %159 = arith.subf %120, %158 : vector<4x8x16xf32>
    %c0_103 = arith.constant 0 : index
    %c1_104 = arith.constant 1 : index
    %c3_105 = arith.constant 3 : index
    %160 = vector.load %arg6[%c0_103, %c1_104, %c3_105] : memref<4x10x22xf32, #tpu.memory_space<vmem>>, vector<4x8x16xf32>
    tpu.vector_store %arg6[%c0_103, %c1_104, %c3_105], %159 {strides = array<i32>} : memref<4x10x22xf32, #tpu.memory_space<vmem>>, vector<4x8x16xf32>,
    %c0_106 = arith.constant 0 : index
    %c0_107 = arith.constant 0 : index
    %c2_108 = arith.constant 2 : index
    %161 = vector.load %arg6[%c0_106, %c0_107, %c2_108] : memref<4x10x22xf32, #tpu.memory_space<vmem>>, vector<4x8x16xf32>
    %162 = vector.broadcast %9 : f32 to vector<4x8x16xf32>
    %163 = arith.mulf %162, %161 : vector<4x8x16xf32>
    %c0_109 = arith.constant 0 : index
    %c0_110 = arith.constant 0 : index
    %c4_111 = arith.constant 4 : index
    %164 = vector.load %arg6[%c0_109, %c0_110, %c4_111] : memref<4x10x22xf32, #tpu.memory_space<vmem>>, vector<4x8x16xf32>
    %165 = vector.broadcast %12 : f32 to vector<4x8x16xf32>
    %166 = arith.mulf %165, %164 : vector<4x8x16xf32>
    %167 = arith.addf %163, %166 : vector<4x8x16xf32>
    %c0_112 = arith.constant 0 : index
    %c0_113 = arith.constant 0 : index
    %c6_114 = arith.constant 6 : index
    %168 = vector.load %arg6[%c0_112, %c0_113, %c6_114] : memref<4x10x22xf32, #tpu.memory_space<vmem>>, vector<4x8x16xf32>
    %169 = vector.broadcast %15 : f32 to vector<4x8x16xf32>
    %170 = arith.mulf %169, %168 : vector<4x8x16xf32>
    %171 = arith.addf %167, %170 : vector<4x8x16xf32>
    %c0_115 = arith.constant 0 : index
    %c1_116 = arith.constant 1 : index
    %c2_117 = arith.constant 2 : index
    %172 = vector.load %arg6[%c0_115, %c1_116, %c2_117] : memref<4x10x22xf32, #tpu.memory_space<vmem>>, vector<4x8x16xf32>
    %173 = vector.broadcast %10 : f32 to vector<4x8x16xf32>
    %174 = arith.mulf %173, %172 : vector<4x8x16xf32>
    %175 = arith.addf %171, %174 : vector<4x8x16xf32>
    %c0_118 = arith.constant 0 : index
    %c1_119 = arith.constant 1 : index
    %c4_120 = arith.constant 4 : index
    %176 = vector.load %arg6[%c0_118, %c1_119, %c4_120] : memref<4x10x22xf32, #tpu.memory_space<vmem>>, vector<4x8x16xf32>
    %177 = vector.broadcast %13 : f32 to vector<4x8x16xf32>
    %178 = arith.mulf %177, %176 : vector<4x8x16xf32>
    %179 = arith.addf %175, %178 : vector<4x8x16xf32>
    %c0_121 = arith.constant 0 : index
    %c1_122 = arith.constant 1 : index
    %c6_123 = arith.constant 6 : index
    %180 = vector.load %arg6[%c0_121, %c1_122, %c6_123] : memref<4x10x22xf32, #tpu.memory_space<vmem>>, vector<4x8x16xf32>
    %181 = vector.broadcast %16 : f32 to vector<4x8x16xf32>
    %182 = arith.mulf %181, %180 : vector<4x8x16xf32>
    %183 = arith.addf %179, %182 : vector<4x8x16xf32>
    %c0_124 = arith.constant 0 : index
    %c2_125 = arith.constant 2 : index
    %c2_126 = arith.constant 2 : index
    %184 = vector.load %arg6[%c0_124, %c2_125, %c2_126] : memref<4x10x22xf32, #tpu.memory_space<vmem>>, vector<4x8x16xf32>
    %185 = vector.broadcast %11 : f32 to vector<4x8x16xf32>
    %186 = arith.mulf %185, %184 : vector<4x8x16xf32>
    %187 = arith.addf %183, %186 : vector<4x8x16xf32>
    %c0_127 = arith.constant 0 : index
    %c2_128 = arith.constant 2 : index
    %c4_129 = arith.constant 4 : index
    %188 = vector.load %arg6[%c0_127, %c2_128, %c4_129] : memref<4x10x22xf32, #tpu.memory_space<vmem>>, vector<4x8x16xf32>
    %189 = vector.broadcast %14 : f32 to vector<4x8x16xf32>
    %190 = arith.mulf %189, %188 : vector<4x8x16xf32>
    %191 = arith.addf %187, %190 : vector<4x8x16xf32>
    %c0_130 = arith.constant 0 : index
    %c2_131 = arith.constant 2 : index
    %c6_132 = arith.constant 6 : index
    %192 = vector.load %arg6[%c0_130, %c2_131, %c6_132] : memref<4x10x22xf32, #tpu.memory_space<vmem>>, vector<4x8x16xf32>
    %193 = vector.broadcast %17 : f32 to vector<4x8x16xf32>
    %194 = arith.mulf %193, %192 : vector<4x8x16xf32>
    %195 = arith.addf %191, %194 : vector<4x8x16xf32>
    %196 = vector.broadcast %19 : f32 to vector<4x8x16xf32>
    %197 = arith.addf %195, %196 : vector<4x8x16xf32>
    %198 = arith.addf %120, %197 : vector<4x8x16xf32>
    %199 = arith.select %40, %198, %159 : vector<4x8x16xi1>, vector<4x8x16xf32>
    %c0_133 = arith.constant 0 : index
    %c0_134 = arith.constant 0 : index
    %c0_135 = arith.constant 0 : index
    %200 = vector.load %arg4[%c0_133, %c0_134, %c0_135] : memref<4x8x16xf32, #tpu.memory_space<vmem>>, vector<4x8x16xf32>
    tpu.vector_store %arg4[%c0_133, %c0_134, %c0_135], %199 {strides = array<i32>} : memref<4x8x16xf32, #tpu.memory_space<vmem>>, vector<4x8x16xf32>,
    %c0_136 = arith.constant 0 : index
    %c1_137 = arith.constant 1 : index
    %c3_138 = arith.constant 3 : index
    %201 = vector.load %arg6[%c0_136, %c1_137, %c3_138] : memref<4x10x22xf32, #tpu.memory_space<vmem>>, vector<4x8x16xf32>
    tpu.vector_store %arg6[%c0_136, %c1_137, %c3_138], %81 {strides = array<i32>} : memref<4x10x22xf32, #tpu.memory_space<vmem>>, vector<4x8x16xf32>,
    %c0_139 = arith.constant 0 : index
    %c0_140 = arith.constant 0 : index
    %c0_141 = arith.constant 0 : index
    %202 = vector.load %arg6[%c0_139, %c0_140, %c0_141] : memref<4x10x22xf32, #tpu.memory_space<vmem>>, vector<4x8x16xf32>
    %203 = vector.broadcast %0 : f32 to vector<4x8x16xf32>
    %204 = arith.mulf %203, %202 : vector<4x8x16xf32>
    %c0_142 = arith.constant 0 : index
    %c0_143 = arith.constant 0 : index
    %c2_144 = arith.constant 2 : index
    %205 = vector.load %arg6[%c0_142, %c0_143, %c2_144] : memref<4x10x22xf32, #tpu.memory_space<vmem>>, vector<4x8x16xf32>
    %206 = vector.broadcast %3 : f32 to vector<4x8x16xf32>
    %207 = arith.mulf %206, %205 : vector<4x8x16xf32>
    %208 = arith.addf %204, %207 : vector<4x8x16xf32>
    %c0_145 = arith.constant 0 : index
    %c0_146 = arith.constant 0 : index
    %c4_147 = arith.constant 4 : index
    %209 = vector.load %arg6[%c0_145, %c0_146, %c4_147] : memref<4x10x22xf32, #tpu.memory_space<vmem>>, vector<4x8x16xf32>
    %210 = vector.broadcast %6 : f32 to vector<4x8x16xf32>
    %211 = arith.mulf %210, %209 : vector<4x8x16xf32>
    %212 = arith.addf %208, %211 : vector<4x8x16xf32>
    %c0_148 = arith.constant 0 : index
    %c1_149 = arith.constant 1 : index
    %c0_150 = arith.constant 0 : index
    %213 = vector.load %arg6[%c0_148, %c1_149, %c0_150] : memref<4x10x22xf32, #tpu.memory_space<vmem>>, vector<4x8x16xf32>
    %214 = vector.broadcast %1 : f32 to vector<4x8x16xf32>
    %215 = arith.mulf %214, %213 : vector<4x8x16xf32>
    %216 = arith.addf %212, %215 : vector<4x8x16xf32>
    %c0_151 = arith.constant 0 : index
    %c1_152 = arith.constant 1 : index
    %c2_153 = arith.constant 2 : index
    %217 = vector.load %arg6[%c0_151, %c1_152, %c2_153] : memref<4x10x22xf32, #tpu.memory_space<vmem>>, vector<4x8x16xf32>
    %218 = vector.broadcast %4 : f32 to vector<4x8x16xf32>
    %219 = arith.mulf %218, %217 : vector<4x8x16xf32>
    %220 = arith.addf %216, %219 : vector<4x8x16xf32>
    %c0_154 = arith.constant 0 : index
    %c1_155 = arith.constant 1 : index
    %c4_156 = arith.constant 4 : index
    %221 = vector.load %arg6[%c0_154, %c1_155, %c4_156] : memref<4x10x22xf32, #tpu.memory_space<vmem>>, vector<4x8x16xf32>
    %222 = vector.broadcast %7 : f32 to vector<4x8x16xf32>
    %223 = arith.mulf %222, %221 : vector<4x8x16xf32>
    %224 = arith.addf %220, %223 : vector<4x8x16xf32>
    %c0_157 = arith.constant 0 : index
    %c2_158 = arith.constant 2 : index
    %c0_159 = arith.constant 0 : index
    %225 = vector.load %arg6[%c0_157, %c2_158, %c0_159] : memref<4x10x22xf32, #tpu.memory_space<vmem>>, vector<4x8x16xf32>
    %226 = vector.broadcast %2 : f32 to vector<4x8x16xf32>
    %227 = arith.mulf %226, %225 : vector<4x8x16xf32>
    %228 = arith.addf %224, %227 : vector<4x8x16xf32>
    %c0_160 = arith.constant 0 : index
    %c2_161 = arith.constant 2 : index
    %c2_162 = arith.constant 2 : index
    %229 = vector.load %arg6[%c0_160, %c2_161, %c2_162] : memref<4x10x22xf32, #tpu.memory_space<vmem>>, vector<4x8x16xf32>
    %230 = vector.broadcast %5 : f32 to vector<4x8x16xf32>
    %231 = arith.mulf %230, %229 : vector<4x8x16xf32>
    %232 = arith.addf %228, %231 : vector<4x8x16xf32>
    %c0_163 = arith.constant 0 : index
    %c2_164 = arith.constant 2 : index
    %c4_165 = arith.constant 4 : index
    %233 = vector.load %arg6[%c0_163, %c2_164, %c4_165] : memref<4x10x22xf32, #tpu.memory_space<vmem>>, vector<4x8x16xf32>
    %234 = vector.broadcast %8 : f32 to vector<4x8x16xf32>
    %235 = arith.mulf %234, %233 : vector<4x8x16xf32>
    %236 = arith.addf %232, %235 : vector<4x8x16xf32>
    %237 = vector.broadcast %18 : f32 to vector<4x8x16xf32>
    %238 = arith.addf %236, %237 : vector<4x8x16xf32>
    %239 = arith.subf %81, %238 : vector<4x8x16xf32>
    %c0_166 = arith.constant 0 : index
    %c1_167 = arith.constant 1 : index
    %c3_168 = arith.constant 3 : index
    %240 = vector.load %arg6[%c0_166, %c1_167, %c3_168] : memref<4x10x22xf32, #tpu.memory_space<vmem>>, vector<4x8x16xf32>
    tpu.vector_store %arg6[%c0_166, %c1_167, %c3_168], %239 {strides = array<i32>} : memref<4x10x22xf32, #tpu.memory_space<vmem>>, vector<4x8x16xf32>,
    %c0_169 = arith.constant 0 : index
    %c0_170 = arith.constant 0 : index
    %c2_171 = arith.constant 2 : index
    %241 = vector.load %arg6[%c0_169, %c0_170, %c2_171] : memref<4x10x22xf32, #tpu.memory_space<vmem>>, vector<4x8x16xf32>
    %242 = vector.broadcast %9 : f32 to vector<4x8x16xf32>
    %243 = arith.mulf %242, %241 : vector<4x8x16xf32>
    %c0_172 = arith.constant 0 : index
    %c0_173 = arith.constant 0 : index
    %c4_174 = arith.constant 4 : index
    %244 = vector.load %arg6[%c0_172, %c0_173, %c4_174] : memref<4x10x22xf32, #tpu.memory_space<vmem>>, vector<4x8x16xf32>
    %245 = vector.broadcast %12 : f32 to vector<4x8x16xf32>
    %246 = arith.mulf %245, %244 : vector<4x8x16xf32>
    %247 = arith.addf %243, %246 : vector<4x8x16xf32>
    %c0_175 = arith.constant 0 : index
    %c0_176 = arith.constant 0 : index
    %c6_177 = arith.constant 6 : index
    %248 = vector.load %arg6[%c0_175, %c0_176, %c6_177] : memref<4x10x22xf32, #tpu.memory_space<vmem>>, vector<4x8x16xf32>
    %249 = vector.broadcast %15 : f32 to vector<4x8x16xf32>
    %250 = arith.mulf %249, %248 : vector<4x8x16xf32>
    %251 = arith.addf %247, %250 : vector<4x8x16xf32>
    %c0_178 = arith.constant 0 : index
    %c1_179 = arith.constant 1 : index
    %c2_180 = arith.constant 2 : index
    %252 = vector.load %arg6[%c0_178, %c1_179, %c2_180] : memref<4x10x22xf32, #tpu.memory_space<vmem>>, vector<4x8x16xf32>
    %253 = vector.broadcast %10 : f32 to vector<4x8x16xf32>
    %254 = arith.mulf %253, %252 : vector<4x8x16xf32>
    %255 = arith.addf %251, %254 : vector<4x8x16xf32>
    %c0_181 = arith.constant 0 : index
    %c1_182 = arith.constant 1 : index
    %c4_183 = arith.constant 4 : index
    %256 = vector.load %arg6[%c0_181, %c1_182, %c4_183] : memref<4x10x22xf32, #tpu.memory_space<vmem>>, vector<4x8x16xf32>
    %257 = vector.broadcast %13 : f32 to vector<4x8x16xf32>
    %258 = arith.mulf %257, %256 : vector<4x8x16xf32>
    %259 = arith.addf %255, %258 : vector<4x8x16xf32>
    %c0_184 = arith.constant 0 : index
    %c1_185 = arith.constant 1 : index
    %c6_186 = arith.constant 6 : index
    %260 = vector.load %arg6[%c0_184, %c1_185, %c6_186] : memref<4x10x22xf32, #tpu.memory_space<vmem>>, vector<4x8x16xf32>
    %261 = vector.broadcast %16 : f32 to vector<4x8x16xf32>
    %262 = arith.mulf %261, %260 : vector<4x8x16xf32>
    %263 = arith.addf %259, %262 : vector<4x8x16xf32>
    %c0_187 = arith.constant 0 : index
    %c2_188 = arith.constant 2 : index
    %c2_189 = arith.constant 2 : index
    %264 = vector.load %arg6[%c0_187, %c2_188, %c2_189] : memref<4x10x22xf32, #tpu.memory_space<vmem>>, vector<4x8x16xf32>
    %265 = vector.broadcast %11 : f32 to vector<4x8x16xf32>
    %266 = arith.mulf %265, %264 : vector<4x8x16xf32>
    %267 = arith.addf %263, %266 : vector<4x8x16xf32>
    %c0_190 = arith.constant 0 : index
    %c2_191 = arith.constant 2 : index
    %c4_192 = arith.constant 4 : index
    %268 = vector.load %arg6[%c0_190, %c2_191, %c4_192] : memref<4x10x22xf32, #tpu.memory_space<vmem>>, vector<4x8x16xf32>
    %269 = vector.broadcast %14 : f32 to vector<4x8x16xf32>
    %270 = arith.mulf %269, %268 : vector<4x8x16xf32>
    %271 = arith.addf %267, %270 : vector<4x8x16xf32>
    %c0_193 = arith.constant 0 : index
    %c2_194 = arith.constant 2 : index
    %c6_195 = arith.constant 6 : index
    %272 = vector.load %arg6[%c0_193, %c2_194, %c6_195] : memref<4x10x22xf32, #tpu.memory_space<vmem>>, vector<4x8x16xf32>
    %273 = vector.broadcast %17 : f32 to vector<4x8x16xf32>
    %274 = arith.mulf %273, %272 : vector<4x8x16xf32>
    %275 = arith.addf %271, %274 : vector<4x8x16xf32>
    %276 = vector.broadcast %19 : f32 to vector<4x8x16xf32>
    %277 = arith.addf %275, %276 : vector<4x8x16xf32>
    %278 = arith.addf %81, %277 : vector<4x8x16xf32>
    %279 = arith.select %40, %278, %239 : vector<4x8x16xi1>, vector<4x8x16xf32>
    %c0_196 = arith.constant 0 : index
    %c0_197 = arith.constant 0 : index
    %c0_198 = arith.constant 0 : index
    %280 = vector.load %arg5[%c0_196, %c0_197, %c0_198] : memref<4x8x16xf32, #tpu.memory_space<vmem>>, vector<4x8x16xf32>
    tpu.vector_store %arg5[%c0_196, %c0_197, %c0_198], %279 {strides = array<i32>} : memref<4x8x16xf32, #tpu.memory_space<vmem>>, vector<4x8x16xf32>,
    return
  }
  func.func @transform_0(%arg0: i32) -> i32 {
    %c0_i32 = arith.constant 0 : i32
    %c0_i32_0 = arith.constant 0 : i32
    return %c0_i32 : i32
  }
  func.func @transform_1(%arg0: i32) -> (i32, i32, i32) {
    %c0_i32 = arith.constant 0 : i32
    %c0_i32_0 = arith.constant 0 : i32
    %c0_i32_1 = arith.constant 0 : i32
    return %arg0, %c0_i32, %c0_i32_0 : i32, i32, i32
  }
  func.func @transform_2(%arg0: i32) -> (i32, i32, i32) {
    %c0_i32 = arith.constant 0 : i32
    %c0_i32_0 = arith.constant 0 : i32
    %c0_i32_1 = arith.constant 0 : i32
    return %arg0, %c0_i32, %c0_i32_0 : i32, i32, i32
  }
  func.func @transform_3(%arg0: i32) -> (i32, i32, i32) {
    %c0_i32 = arith.constant 0 : i32
    %c0_i32_0 = arith.constant 0 : i32
    %c0_i32_1 = arith.constant 0 : i32
    return %arg0, %c0_i32, %c0_i32_0 : i32, i32, i32
  }
  func.func @transform_4(%arg0: i32) -> (i32, i32, i32) {
    %c0_i32 = arith.constant 0 : i32
    %c0_i32_0 = arith.constant 0 : i32
    %c0_i32_1 = arith.constant 0 : i32
    return %arg0, %c0_i32, %c0_i32_0 : i32, i32, i32
  }
}

</mosaic_0001>

<llo_original>
// kernel: learn_wavelet_forward.1
$region0: #{learn_wavelet_forward.1}
  #allocation0 [shape = 'u32[]', space=smem, size = 0x4, offset = 0x4, fixed_abs, tag = 'smem constant byte address 0x4 - core index']
  #allocation1 [shape = 'u32[144,128]{1,0:T(1,128)}', space=vmem, size = 0x12000, scoped, tag = 'internal scratch']
  #allocation2 [shape = 'f32[4,10,22]{2,1,0:T(8,128)}', space=vmem, size = 0x8000, scoped, tag = 'scratch operand']
  %s0 = inlined_call_operand.vmem [shape: f32[20], index: 0, kind: input, shape index: {}]
  %s1 = inlined_call_operand.vmem [shape: f32[8,8,16], index: 1, kind: input, shape index: {}]
  %s2 = inlined_call_operand.vmem [shape: f32[8,8,16], index: 2, kind: input, shape index: {}]
  %s3 = inlined_call_operand.vmem [shape: f32[8,8,16], index: 3, kind: output, shape index: {0}]
  %s4 = inlined_call_operand.vmem [shape: f32[8,8,16], index: 4, kind: output, shape index: {1}]
  %5 = xla_tuple %s3, %s4
  %s6 = sld [smem:[#allocation0]]
  $region57: #{learn_wavelet_forward.1} parent=0
    _
  %s8 = ssub.s32 1, %s6
  %s9 = scalar_select 0, %s8, %s6
  $region1: #{learn_wavelet_forward.1} parent=0
    #allocation3 [shape = 'u8[512]{0}', space=smem, size = 0x200, scoped, tag = 'input window, operand 0, single buffered']
    #allocation4 [shape = 's32[2]{0}', space=sflag, size = 0x8, scoped, tag = 'scoped memory for learn_wavelet_forward.1']
    %10 = vsyncpa [#allocation4], 0
    loop: start=0, step=1, limit=4
    $region2: #{learn_wavelet_forward.1} parent=1 // loop_pre_header
      _
    $region3: #{learn_wavelet_forward.1} parent=1 // loop_header
      %s12 = sphi 0, %s16
      %p13 = scmp.ge.s32.totalorder %s12, 4
      %s20 = sphi 0, %s20
      %s22 = sphi 0, %s20
      %s23 = sphi 0, %s22
      %s37 = sphi 0, %s23
      %s43 = sphi 0, %s45
      %s46 = sphi 0, %s43
      %s47 = sphi 0, %s46
      %s63 = sphi 0, %s47
      %s69 = sphi 0, %s71
      %s72 = sphi 0, %s69
      %s73 = sphi 0, %s72
      %s89 = sphi 0, %s73
      %s95 = sphi 0, %s97
      %s98 = sphi 0, %s95
      %s99 = sphi 0, %s98
      %s115 = sphi 0, %s99
      %s121 = sphi 0, %s123
      %s124 = sphi 0, %s121
      %s125 = sphi 0, %s124
      %s141 = sphi 0, %s125
    $region4: #{learn_wavelet_forward.1} parent=1 // loop_header_branch
      %15 = sbr.rel (%p13) target = $region8
    $region5: #{learn_wavelet_forward.1} parent=1 // loop_body
      %s17 = ssub.s32 %s12, 1
      %s18 = ssub.s32 %s12, 2
      %s19 = sadd.s32 %s12, 1
      %s21 = sadd.s32 %s20, 1
      %p24 = scmp.eq.s32.totalorder %s12, 1
      %p25 = scmp.ne.s32.totalorder %s20, %s22
      %p26 = scmp.eq.s32.totalorder %s12, 0
      %p27 = por %p25, %p26
      %p28 = scmp.ne.s32.totalorder %s20, %s22
      %p29 = scmp.eq.s32.totalorder %s17, 1
      %p30 = por %p28, %p29
      %p31 = scmp.ne.s32.totalorder %s22, %s23
      %p32 = scmp.eq.s32.totalorder %s17, 0
      %p33 = por %p31, %p32
      %p34 = scmp.ne.s32.totalorder %s22, %s23
      %p35 = scmp.eq.s32.totalorder %s18, 1
      %p36 = por %p34, %p35
      %p38 = scmp.ne.s32.totalorder %s23, %s37
      %p39 = scmp.eq.s32.totalorder %s18, 0
      %p40 = por %p38, %p39
      %s41 = ssub.s32 %s12, %s19
      %p42 = scmp.eq.s32.totalorder %s41, 0
      %s44 = sadd.s32 %s43, 1
      %s45 = scalar_select %p42, %s43, %s44
      %p48 = pneg %p42
      %p49 = scmp.eq.s32.totalorder %s12, 1
      %p50 = por %p48, %p49
      %p51 = scmp.ne.s32.totalorder %s43, %s46
      %p52 = scmp.eq.s32.totalorder %s12, 0
      %p53 = por %p51, %p52
      %p54 = scmp.ne.s32.totalorder %s43, %s46
      %p55 = scmp.eq.s32.totalorder %s17, 1
      %p56 = por %p54, %p55
      %p57 = scmp.ne.s32.totalorder %s46, %s47
      %p58 = scmp.eq.s32.totalorder %s17, 0
      %p59 = por %p57, %p58
      %p60 = scmp.ne.s32.totalorder %s46, %s47
      %p61 = scmp.eq.s32.totalorder %s18, 1
      %p62 = por %p60, %p61
      %p64 = scmp.ne.s32.totalorder %s47, %s63
      %p65 = scmp.eq.s32.totalorder %s18, 0
      %p66 = por %p64, %p65
      %s67 = ssub.s32 %s12, %s19
      %p68 = scmp.eq.s32.totalorder %s67, 0
      %s70 = sadd.s32 %s69, 1
      %s71 = scalar_select %p68, %s69, %s70
      %p74 = pneg %p68
      %p75 = scmp.eq.s32.totalorder %s12, 1
      %p76 = por %p74, %p75
      %p77 = scmp.ne.s32.totalorder %s69, %s72
      %p78 = scmp.eq.s32.totalorder %s12, 0
      %p79 = por %p77, %p78
      %p80 = scmp.ne.s32.totalorder %s69, %s72
      %p81 = scmp.eq.s32.totalorder %s17, 1
      %p82 = por %p80, %p81
      %p83 = scmp.ne.s32.totalorder %s72, %s73
      %p84 = scmp.eq.s32.totalorder %s17, 0
      %p85 = por %p83, %p84
      %p86 = scmp.ne.s32.totalorder %s72, %s73
      %p87 = scmp.eq.s32.totalorder %s18, 1
      %p88 = por %p86, %p87
      %p90 = scmp.ne.s32.totalorder %s73, %s89
      %p91 = scmp.eq.s32.totalorder %s18, 0
      %p92 = por %p90, %p91
      %s93 = ssub.s32 %s12, %s19
      %p94 = scmp.eq.s32.totalorder %s93, 0
      %s96 = sadd.s32 %s95, 1
      %s97 = scalar_select %p94, %s95, %s96
      %p100 = pneg %p94
      %p101 = scmp.eq.s32.totalorder %s12, 1
      %p102 = por %p100, %p101
      %p103 = scmp.ne.s32.totalorder %s95, %s98
      %p104 = scmp.eq.s32.totalorder %s12, 0
      %p105 = por %p103, %p104
      %p106 = scmp.ne.s32.totalorder %s95, %s98
      %p107 = scmp.eq.s32.totalorder %s17, 1
      %p108 = por %p106, %p107
      %p109 = scmp.ne.s32.totalorder %s98, %s99
      %p110 = scmp.eq.s32.totalorder %s17, 0
      %p111 = por %p109, %p110
      %p112 = scmp.ne.s32.totalorder %s98, %s99
      %p113 = scmp.eq.s32.totalorder %s18, 1
      %p114 = por %p112, %p113
      %p116 = scmp.ne.s32.totalorder %s99, %s115
      %p117 = scmp.eq.s32.totalorder %s18, 0
      %p118 = por %p116, %p117
      %s119 = ssub.s32 %s12, %s19
      %p120 = scmp.eq.s32.totalorder %s119, 0
      %s122 = sadd.s32 %s121, 1
      %s123 = scalar_select %p120, %s121, %s122
      %p126 = pneg %p120
      %p127 = scmp.eq.s32.totalorder %s12, 1
      %p128 = por %p126, %p127
      %p129 = scmp.ne.s32.totalorder %s121, %s124
      %p130 = scmp.eq.s32.totalorder %s12, 0
      %p131 = por %p129, %p130
      %p132 = scmp.ne.s32.totalorder %s121, %s124
      %p133 = scmp.eq.s32.totalorder %s17, 1
      %p134 = por %p132, %p133
      %p135 = scmp.ne.s32.totalorder %s124, %s125
      %p136 = scmp.eq.s32.totalorder %s17, 0
      %p137 = por %p135, %p136
      %p138 = scmp.ne.s32.totalorder %s124, %s125
      %p139 = scmp.eq.s32.totalorder %s18, 1
      %p140 = por %p138, %p139
      %p142 = scmp.ne.s32.totalorder %s125, %s141
      %p143 = scmp.eq.s32.totalorder %s18, 0
      %p144 = por %p142, %p143
      %p145 = scmp.le.s32.totalorder 1, %s12
      %p146 = scmp.lt.s32.totalorder %s12, 3
      %p147 = pnand %p145, %p146
      %p148 = pneg %p147
      // Predicated region
      $region9: #{learn_wavelet_forward.1} parent=5 // pred_check
        _
      $region10: #{learn_wavelet_forward.1} parent=5 // pred_check_branch
        %150 = sbr.rel (%p147) target = $region12
      $region11: #{learn_wavelet_forward.1} parent=5 // pred_region
        %s151 = ssub.s32 %s12, 1
        // Predicated region
        $region13: #{learn_wavelet_forward.1} parent=11 // pred_check
          %p152 = pneg %p33
        $region14: #{learn_wavelet_forward.1} parent=11 // pred_check_branch
          %154 = sbr.rel (%p152) target = $region16
        $region15: #{learn_wavelet_forward.1} parent=11 // pred_region
          %s156 = ssub.s32 16, 16
          %157 = vsyncadd [#allocation4], %s156
          %s159 = sshll.u32 %s0, 4
          %s160 = int_to_ptr.vmem [resolvable:$true] %s159
          %162 = dma.vmem_to_smem %s160, 16, [#allocation3], [#allocation4]
        $region16: #{learn_wavelet_forward.1} parent=11 // pred_fallthru
          _
      $region12: #{learn_wavelet_forward.1} parent=5 // pred_fallthru
        _
      %p163 = scmp.lt.s32.totalorder %s12, 2
      // Predicated region
      $region17: #{learn_wavelet_forward.1} parent=5 // pred_check
        %p164 = pneg %p163
      $region18: #{learn_wavelet_forward.1} parent=5 // pred_check_branch
        %166 = sbr.rel (%p164) target = $region20
      $region19: #{learn_wavelet_forward.1} parent=5 // pred_region
        // Predicated region
        $region21: #{learn_wavelet_forward.1} parent=19 // pred_check
          %p167 = pneg %p53
        $region22: #{learn_wavelet_forward.1} parent=19 // pred_check_branch
          %169 = sbr.rel (%p167) target = $region24
        $region23: #{learn_wavelet_forward.1} parent=19 // pred_region
          %s170 = smul.u32 4, %s12
          %p171 = scmp.lt.s32.totalorder %s170, 7
          %s172 = scalar_select %p171, %s170, 7
          %s173 = smul.addr %s172, 8
          %s174 = scalar_lea.vmem %s1, %s173
          %s175 = smul.u32 4, %s12
        $region24: #{learn_wavelet_forward.1} parent=19 // pred_fallthru
          _
        // Predicated region
        $region25: #{learn_wavelet_forward.1} parent=19 // pred_check
          %p176 = pneg %p79
        $region26: #{learn_wavelet_forward.1} parent=19 // pred_check_branch
          %178 = sbr.rel (%p176) target = $region28
        $region27: #{learn_wavelet_forward.1} parent=19 // pred_region
          %s179 = smul.u32 4, %s12
          %p180 = scmp.lt.s32.totalorder %s179, 7
          %s181 = scalar_select %p180, %s179, 7
          %s182 = smul.addr %s181, 8
          %s183 = scalar_lea.vmem %s2, %s182
          %s184 = smul.u32 4, %s12
        $region28: #{learn_wavelet_forward.1} parent=19 // pred_fallthru
          _
      $region20: #{learn_wavelet_forward.1} parent=5 // pred_fallthru
        _
      %p185 = scmp.le.s32.totalorder 1, %s12
      %p186 = scmp.lt.s32.totalorder %s12, 3
      %p187 = pnand %p185, %p186
      %p188 = pneg %p187
      // Predicated region
      $region29: #{learn_wavelet_forward.1} parent=5 // pred_check
        _
      $region30: #{learn_wavelet_forward.1} parent=5 // pred_check_branch
        %190 = sbr.rel (%p187) target = $region32
      $region31: #{learn_wavelet_forward.1} parent=5 // pred_region
        %s191 = ssub.s32 %s12, 1
        // Predicated region
        $region33: #{learn_wavelet_forward.1} parent=31 // pred_check
          %p192 = pneg %p33
        $region34: #{learn_wavelet_forward.1} parent=31 // pred_check_branch
          %194 = sbr.rel (%p192) target = $region36
        $region35: #{learn_wavelet_forward.1} parent=31 // pred_region
          %195 = dma.done [#allocation4], 16
        $region36: #{learn_wavelet_forward.1} parent=31 // pred_fallthru
          _
        %196 = sfence
        %p197 = pneg %p33
        %p198 = pneg %p30
        %s199 = smul.u32 4, %s17
        %p200 = scmp.lt.s32.totalorder %s199, 7
        %s201 = scalar_select %p200, %s199, 7
        %s202 = smul.addr %s201, 8
        %s203 = scalar_lea.vmem %s1, %s202
        %p204 = pneg %p59
        %p205 = pneg %p56
        %s206 = smul.u32 4, %s17
        %p207 = scmp.lt.s32.totalorder %s206, 7
        %s208 = scalar_select %p207, %s206, 7
        %s209 = smul.addr %s208, 8
        %s210 = scalar_lea.vmem %s2, %s209
        %p211 = pneg %p85
        %p212 = pneg %p82
        %p213 = pneg %p111
        %p214 = pneg %p108
        %s215 = smul.u32 4, %s17
        %p216 = scmp.lt.s32.totalorder %s215, 7
        %s217 = scalar_select %p216, %s215, 7
        %s218 = smul.addr %s217, 8
        %s219 = scalar_lea.vmem %s3, %s218
        %p220 = pneg %p137
        %p221 = pneg %p134
        %s222 = smul.u32 4, %s17
        %p223 = scmp.lt.s32.totalorder %s222, 7
        %s224 = scalar_select %p223, %s222, 7
        %s225 = smul.addr %s224, 8
        %s226 = scalar_lea.vmem %s4, %s225
        %s227 = smul.u32 4, %s17
        %p228 = scmp.lt.s32.totalorder %s227, 7
        %s229 = scalar_select %p228, %s227, 7
        %s230 = smul.addr %s229, 8
        %s231 = scalar_lea.vmem %s1, %s230
        %s232 = smul.u32 4, %s17
        %s233 = smul.u32 4, %s17
        %p234 = scmp.lt.s32.totalorder %s233, 7
        %s235 = scalar_select %p234, %s233, 7
        %s236 = smul.addr %s235, 8
        %s237 = scalar_lea.vmem %s2, %s236
        %s238 = smul.u32 4, %s17
        %s239 = smul.u32 4, %s17
        %p240 = scmp.lt.s32.totalorder %s239, 7
        %s241 = scalar_select %p240, %s239, 7
        %s242 = smul.addr %s241, 8
        %s243 = scalar_lea.vmem %s3, %s242
        %s244 = smul.u32 4, %s17
        %s245 = smul.u32 4, %s17
        %p246 = scmp.lt.s32.totalorder %s245, 7
        %s247 = scalar_select %p246, %s245, 7
        %s248 = smul.addr %s247, 8
        %s249 = scalar_lea.vmem %s4, %s248
        %s250 = smul.u32 4, %s17
        %s251 = sld [smem:[#allocation3]]
        %s252 = sld [smem:[#allocation3 + $0x1]]
        %s253 = sld [smem:[#allocation3 + $0x2]]
        %s254 = sld [smem:[#allocation3 + $0x3]]
        %s255 = sld [smem:[#allocation3 + $0x4]]
        %s256 = sld [smem:[#allocation3 + $0x5]]
        %s257 = sld [smem:[#allocation3 + $0x6]]
        %s258 = sld [smem:[#allocation3 + $0x7]]
        %s259 = sld [smem:[#allocation3 + $0x8]]
        %s260 = sld [smem:[#allocation3 + $0x9]]
        %s261 = sld [smem:[#allocation3 + $0xa]]
        %s262 = sld [smem:[#allocation3 + $0xb]]
        %s263 = sld [smem:[#allocation3 + $0xc]]
        %s264 = sld [smem:[#allocation3 + $0xd]]
        %s265 = sld [smem:[#allocation3 + $0xe]]
        %s266 = sld [smem:[#allocation3 + $0xf]]
        %s267 = sld [smem:[#allocation3 + $0x10]]
        %s268 = sld [smem:[#allocation3 + $0x11]]
        %s269 = sld [smem:[#allocation3 + $0x12]]
        %s270 = sld [smem:[#allocation3 + $0x13]]
        %vm271 = vcmask 179200
        %272 = vst.msk [vmem:[#allocation2] sm:$0xff] %vm271, 0.0
        %vm273 = vcmask 173056
        %274 = vst.msk [vmem:[#allocation2 + $0x8] sm:$0x3] %vm273, 0.0
        %275 = vst.msk [vmem:[#allocation2 + $0x10] sm:$0xff] %vm271, 0.0
        %276 = vst.msk [vmem:[#allocation2 + $0x18] sm:$0x3] %vm273, 0.0
        %277 = vst.msk [vmem:[#allocation2 + $0x20] sm:$0xff] %vm271, 0.0
        %278 = vst.msk [vmem:[#allocation2 + $0x28] sm:$0x3] %vm273, 0.0
        %279 = vst.msk [vmem:[#allocation2 + $0x30] sm:$0xff] %vm271, 0.0
        %280 = vst.msk [vmem:[#allocation2 + $0x38] sm:$0x3] %vm273, 0.0
        %v281 = vlaneseq
        %v282 = vand.u32 %v281, 127
        %vm283 = vcmp.lt.s32.totalorder %v282, 0
        %v284 = vsub.s32 0, %v282
        %v285 = vsel %vm283, %v284, %v282
        %v286 = vshrl.u32 %v285, 1
        %v287 = vand.u32 %v285, 1
        %v288 = vsub.s32 0, %v287
        %v289 = vsel %vm283, %v288, %v287
        %vm290 = vcmp.ne.s32.totalorder %v289, 0
        %vm291 = vcmp.lt.s32.totalorder %v289, 0
        %vm292 = vmand %vm291, %vm290
        %v293 = vadd.s32 %v289, 2
        %v294 = vsel %vm292, %v293, %v289
        %vm295 = vcmp.eq.s32.totalorder %v294, 0
        %v296 = vld [vmem:[%s231] sm:$0xff]
        %v297 = vld [vmem:[%s231 + $0x8] sm:$0xff]
        %v298 = vld [vmem:[%s231 + $0x10] sm:$0xff]
        %v299 = vld [vmem:[%s231 + $0x18] sm:$0xff]
        %v300 = vld [vmem:[%s237] sm:$0xff]
        %v301 = vld [vmem:[%s237 + $0x8] sm:$0xff]
        %v302 = vld [vmem:[%s237 + $0x10] sm:$0xff]
        %v303 = vld [vmem:[%s237 + $0x18] sm:$0xff]
        %308 = vrot.lane.b32.xlu0 %v296, 3
        %v309 = vpop.permute.xlu0 %308
        %310 = vrot.lane.b32.xlu0 %v297, 3
        %v311 = vpop.permute.xlu0 %310
        %312 = vrot.lane.b32.xlu0 %v298, 3
        %v313 = vpop.permute.xlu0 %312
        %314 = vrot.lane.b32.xlu0 %v299, 3
        %v315 = vpop.permute.xlu0 %314
        %vm320 = vcmask 154648
        %321 = vst.msk [vmem:[#allocation2 + $0x1] sm:$0xff] %vm320, %v309
        %322 = vst.msk [vmem:[#allocation2 + $0x11] sm:$0xff] %vm320, %v311
        %323 = vst.msk [vmem:[#allocation2 + $0x21] sm:$0xff] %vm320, %v313
        %324 = vst.msk [vmem:[#allocation2 + $0x31] sm:$0xff] %vm320, %v315
        %v325 = vld [vmem:[#allocation2] sm:$0xff]
        %v326 = vld [vmem:[#allocation2 + $0x10] sm:$0xff]
        %v327 = vld [vmem:[#allocation2 + $0x20] sm:$0xff]
        %v328 = vld [vmem:[#allocation2 + $0x30] sm:$0xff]
        %v329 = vstv %s251
        %v330 = vmul.f32 %v329, %v325
        %v331 = vmul.f32 %v329, %v326
        %v332 = vmul.f32 %v329, %v327
        %v333 = vmul.f32 %v329, %v328
        %v334 = vstv %s252
        %v335 = vmul.f32 %v334, %v325
        %v336 = vmul.f32 %v334, %v326
        %v337 = vmul.f32 %v334, %v327
        %v338 = vmul.f32 %v334, %v328
        %343 = vrot.lane.b32.xlu0 %v335, 127
        %v344 = vpop.permute.xlu0 %343
        %345 = vrot.lane.b32.xlu0 %v336, 127
        %v346 = vpop.permute.xlu0 %345
        %347 = vrot.lane.b32.xlu0 %v337, 127
        %v348 = vpop.permute.xlu0 %347
        %349 = vrot.lane.b32.xlu0 %v338, 127
        %v350 = vpop.permute.xlu0 %349
        %v355 = vadd.f32 %v330, %v344
        %v356 = vadd.f32 %v331, %v346
        %v357 = vadd.f32 %v332, %v348
        %v358 = vadd.f32 %v333, %v350
        %v359 = vstv %s253
        %v360 = vmul.f32 %v359, %v325
        %v361 = vmul.f32 %v359, %v326
        %v362 = vmul.f32 %v359, %v327
        %v363 = vmul.f32 %v359, %v328
        %368 = vrot.lane.b32.xlu0 %v360, 126
        %v369 = vpop.permute.xlu0 %368
        %370 = vrot.lane.b32.xlu0 %v361, 126
        %v371 = vpop.permute.xlu0 %370
        %372 = vrot.lane.b32.xlu0 %v362, 126
        %v373 = vpop.permute.xlu0 %372
        %374 = vrot.lane.b32.xlu0 %v363, 126
        %v375 = vpop.permute.xlu0 %374
        %v380 = vadd.f32 %v355, %v369
        %v381 = vadd.f32 %v356, %v371
        %v382 = vadd.f32 %v357, %v373
        %v383 = vadd.f32 %v358, %v375
        %v384 = vld [vmem:[#allocation2 + $0x1] sm:$0xff]
        %v385 = vld [vmem:[#allocation2 + $0x11] sm:$0xff]
        %v386 = vld [vmem:[#allocation2 + $0x21] sm:$0xff]
        %v387 = vld [vmem:[#allocation2 + $0x31] sm:$0xff]
        %v388 = vstv %s254
        %v389 = vmul.f32 %v388, %v384
        %v390 = vmul.f32 %v388, %v385
        %v391 = vmul.f32 %v388, %v386
        %v392 = vmul.f32 %v388, %v387
        %v393 = vadd.f32 %v380, %v389
        %v394 = vadd.f32 %v381, %v390
        %v395 = vadd.f32 %v382, %v391
        %v396 = vadd.f32 %v383, %v392
        %v397 = vstv %s255
        %v398 = vmul.f32 %v397, %v384
        %v399 = vmul.f32 %v397, %v385
        %v400 = vmul.f32 %v397, %v386
        %v401 = vmul.f32 %v397, %v387
        %406 = vrot.lane.b32.xlu0 %v398, 127
        %v407 = vpop.permute.xlu0 %406
        %408 = vrot.lane.b32.xlu0 %v399, 127
        %v409 = vpop.permute.xlu0 %408
        %410 = vrot.lane.b32.xlu0 %v400, 127
        %v411 = vpop.permute.xlu0 %410
        %412 = vrot.lane.b32.xlu0 %v401, 127
        %v413 = vpop.permute.xlu0 %412
        %v418 = vadd.f32 %v393, %v407
        %v419 = vadd.f32 %v394, %v409
        %v420 = vadd.f32 %v395, %v411
        %v421 = vadd.f32 %v396, %v413
        %v422 = vstv %s256
        %v423 = vmul.f32 %v422, %v384
        %v424 = vmul.f32 %v422, %v385
        %v425 = vmul.f32 %v422, %v386
        %v426 = vmul.f32 %v422, %v387
        %431 = vrot.lane.b32.xlu0 %v423, 126
        %v432 = vpop.permute.xlu0 %431
        %433 = vrot.lane.b32.xlu0 %v424, 126
        %v434 = vpop.permute.xlu0 %433
        %435 = vrot.lane.b32.xlu0 %v425, 126
        %v436 = vpop.permute.xlu0 %435
        %437 = vrot.lane.b32.xlu0 %v426, 126
        %v438 = vpop.permute.xlu0 %437
        %v443 = vadd.f32 %v418, %v432
        %v444 = vadd.f32 %v419, %v434
        %v445 = vadd.f32 %v420, %v436
        %v446 = vadd.f32 %v421, %v438
        %v447 = vld [vmem:[#allocation2 + $0x2] sm:$0xff]
        %v448 = vld [vmem:[#allocation2 + $0x12] sm:$0xff]
        %v449 = vld [vmem:[#allocation2 + $0x22] sm:$0xff]
        %v450 = vld [vmem:[#allocation2 + $0x32] sm:$0xff]
        %v451 = vstv %s257
        %v452 = vmul.f32 %v451, %v447
        %v453 = vmul.f32 %v451, %v448
        %v454 = vmul.f32 %v451, %v449
        %v455 = vmul.f32 %v451, %v450
        %v456 = vadd.f32 %v443, %v452
        %v457 = vadd.f32 %v444, %v453
        %v458 = vadd.f32 %v445, %v454
        %v459 = vadd.f32 %v446, %v455
        %v460 = vstv %s258
        %v461 = vmul.f32 %v460, %v447
        %v462 = vmul.f32 %v460, %v448
        %v463 = vmul.f32 %v460, %v449
        %v464 = vmul.f32 %v460, %v450
        %469 = vrot.lane.b32.xlu0 %v461, 127
        %v470 = vpop.permute.xlu0 %469
        %471 = vrot.lane.b32.xlu0 %v462, 127
        %v472 = vpop.permute.xlu0 %471
        %473 = vrot.lane.b32.xlu0 %v463, 127
        %v474 = vpop.permute.xlu0 %473
        %475 = vrot.lane.b32.xlu0 %v464, 127
        %v476 = vpop.permute.xlu0 %475
        %v481 = vadd.f32 %v456, %v470
        %v482 = vadd.f32 %v457, %v472
        %v483 = vadd.f32 %v458, %v474
        %v484 = vadd.f32 %v459, %v476
        %v485 = vstv %s259
        %v486 = vmul.f32 %v485, %v447
        %v487 = vmul.f32 %v485, %v448
        %v488 = vmul.f32 %v485, %v449
        %v489 = vmul.f32 %v485, %v450
        %494 = vrot.lane.b32.xlu0 %v486, 126
        %v495 = vpop.permute.xlu0 %494
        %496 = vrot.lane.b32.xlu0 %v487, 126
        %v497 = vpop.permute.xlu0 %496
        %498 = vrot.lane.b32.xlu0 %v488, 126
        %v499 = vpop.permute.xlu0 %498
        %500 = vrot.lane.b32.xlu0 %v489, 126
        %v501 = vpop.permute.xlu0 %500
        %v506 = vadd.f32 %v481, %v495
        %v507 = vadd.f32 %v482, %v497
        %v508 = vadd.f32 %v483, %v499
        %v509 = vadd.f32 %v484, %v501
        %v510 = vstv %s269
        %v511 = vadd.f32 %v506, %v510
        %v512 = vadd.f32 %v507, %v510
        %v513 = vadd.f32 %v508, %v510
        %v514 = vadd.f32 %v509, %v510
        %519 = vrot.lane.b32.xlu0 %v511, 126
        %v520 = vpop.permute.xlu0 %519
        %521 = vrot.lane.b32.xlu0 %v512, 126
        %v522 = vpop.permute.xlu0 %521
        %523 = vrot.lane.b32.xlu0 %v513, 126
        %v524 = vpop.permute.xlu0 %523
        %525 = vrot.lane.b32.xlu0 %v514, 126
        %v526 = vpop.permute.xlu0 %525
        %v531 = vsub.f32 %v300, %v520
        %v532 = vsub.f32 %v301, %v522
        %v533 = vsub.f32 %v302, %v524
        %v534 = vsub.f32 %v303, %v526
        %539 = vrot.lane.b32.xlu0 %v531, 3
        %v540 = vpop.permute.xlu0 %539
        %541 = vrot.lane.b32.xlu0 %v532, 3
        %v542 = vpop.permute.xlu0 %541
        %543 = vrot.lane.b32.xlu0 %v533, 3
        %v544 = vpop.permute.xlu0 %543
        %545 = vrot.lane.b32.xlu0 %v534, 3
        %v546 = vpop.permute.xlu0 %545
        %551 = vst.msk [vmem:[#allocation2 + $0x1] sm:$0xff] %vm320, %v540
        %552 = vst.msk [vmem:[#allocation2 + $0x11] sm:$0xff] %vm320, %v542
        %553 = vst.msk [vmem:[#allocation2 + $0x21] sm:$0xff] %vm320, %v544
        %554 = vst.msk [vmem:[#allocation2 + $0x31] sm:$0xff] %vm320, %v546
        %v555 = vld [vmem:[#allocation2] sm:$0xff]
        %v556 = vld [vmem:[#allocation2 + $0x10] sm:$0xff]
        %v557 = vld [vmem:[#allocation2 + $0x20] sm:$0xff]
        %v558 = vld [vmem:[#allocation2 + $0x30] sm:$0xff]
        %v559 = vstv %s260
        %v560 = vmul.f32 %v559, %v555
        %v561 = vmul.f32 %v559, %v556
        %v562 = vmul.f32 %v559, %v557
        %v563 = vmul.f32 %v559, %v558
        %v564 = vstv %s261
        %v565 = vmul.f32 %v564, %v555
        %v566 = vmul.f32 %v564, %v556
        %v567 = vmul.f32 %v564, %v557
        %v568 = vmul.f32 %v564, %v558
        %573 = vrot.lane.b32.xlu0 %v565, 127
        %v574 = vpop.permute.xlu0 %573
        %575 = vrot.lane.b32.xlu0 %v566, 127
        %v576 = vpop.permute.xlu0 %575
        %577 = vrot.lane.b32.xlu0 %v567, 127
        %v578 = vpop.permute.xlu0 %577
        %579 = vrot.lane.b32.xlu0 %v568, 127
        %v580 = vpop.permute.xlu0 %579
        %v585 = vadd.f32 %v560, %v574
        %v586 = vadd.f32 %v561, %v576
        %v587 = vadd.f32 %v562, %v578
        %v588 = vadd.f32 %v563, %v580
        %v589 = vstv %s262
        %v590 = vmul.f32 %v589, %v555
        %v591 = vmul.f32 %v589, %v556
        %v592 = vmul.f32 %v589, %v557
        %v593 = vmul.f32 %v589, %v558
        %598 = vrot.lane.b32.xlu0 %v590, 126
        %v599 = vpop.permute.xlu0 %598
        %600 = vrot.lane.b32.xlu0 %v591, 126
        %v601 = vpop.permute.xlu0 %600
        %602 = vrot.lane.b32.xlu0 %v592, 126
        %v603 = vpop.permute.xlu0 %602
        %604 = vrot.lane.b32.xlu0 %v593, 126
        %v605 = vpop.permute.xlu0 %604
        %v610 = vadd.f32 %v585, %v599
        %v611 = vadd.f32 %v586, %v601
        %v612 = vadd.f32 %v587, %v603
        %v613 = vadd.f32 %v588, %v605
        %v614 = vld [vmem:[#allocation2 + $0x1] sm:$0xff]
        %v615 = vld [vmem:[#allocation2 + $0x11] sm:$0xff]
        %v616 = vld [vmem:[#allocation2 + $0x21] sm:$0xff]
        %v617 = vld [vmem:[#allocation2 + $0x31] sm:$0xff]
        %v618 = vstv %s263
        %v619 = vmul.f32 %v618, %v614
        %v620 = vmul.f32 %v618, %v615
        %v621 = vmul.f32 %v618, %v616
        %v622 = vmul.f32 %v618, %v617
        %v623 = vadd.f32 %v610, %v619
        %v624 = vadd.f32 %v611, %v620
        %v625 = vadd.f32 %v612, %v621
        %v626 = vadd.f32 %v613, %v622
        %v627 = vstv %s264
        %v628 = vmul.f32 %v627, %v614
        %v629 = vmul.f32 %v627, %v615
        %v630 = vmul.f32 %v627, %v616
        %v631 = vmul.f32 %v627, %v617
        %636 = vrot.lane.b32.xlu0 %v628, 127
        %v637 = vpop.permute.xlu0 %636
        %638 = vrot.lane.b32.xlu0 %v629, 127
        %v639 = vpop.permute.xlu0 %638
        %640 = vrot.lane.b32.xlu0 %v630, 127
        %v641 = vpop.permute.xlu0 %640
        %642 = vrot.lane.b32.xlu0 %v631, 127
        %v643 = vpop.permute.xlu0 %642
        %v648 = vadd.f32 %v623, %v637
        %v649 = vadd.f32 %v624, %v639
        %v650 = vadd.f32 %v625, %v641
        %v651 = vadd.f32 %v626, %v643
        %v652 = vstv %s265
        %v653 = vmul.f32 %v652, %v614
        %v654 = vmul.f32 %v652, %v615
        %v655 = vmul.f32 %v652, %v616
        %v656 = vmul.f32 %v652, %v617
        %661 = vrot.lane.b32.xlu0 %v653, 126
        %v662 = vpop.permute.xlu0 %661
        %663 = vrot.lane.b32.xlu0 %v654, 126
        %v664 = vpop.permute.xlu0 %663
        %665 = vrot.lane.b32.xlu0 %v655, 126
        %v666 = vpop.permute.xlu0 %665
        %667 = vrot.lane.b32.xlu0 %v656, 126
        %v668 = vpop.permute.xlu0 %667
        %v673 = vadd.f32 %v648, %v662
        %v674 = vadd.f32 %v649, %v664
        %v675 = vadd.f32 %v650, %v666
        %v676 = vadd.f32 %v651, %v668
        %v677 = vld [vmem:[#allocation2 + $0x2] sm:$0xff]
        %v678 = vld [vmem:[#allocation2 + $0x12] sm:$0xff]
        %v679 = vld [vmem:[#allocation2 + $0x22] sm:$0xff]
        %v680 = vld [vmem:[#allocation2 + $0x32] sm:$0xff]
        %v681 = vstv %s266
        %v682 = vmul.f32 %v681, %v677
        %v683 = vmul.f32 %v681, %v678
        %v684 = vmul.f32 %v681, %v679
        %v685 = vmul.f32 %v681, %v680
        %v686 = vadd.f32 %v673, %v682
        %v687 = vadd.f32 %v674, %v683
        %v688 = vadd.f32 %v675, %v684
        %v689 = vadd.f32 %v676, %v685
        %v690 = vstv %s267
        %v691 = vmul.f32 %v690, %v677
        %v692 = vmul.f32 %v690, %v678
        %v693 = vmul.f32 %v690, %v679
        %v694 = vmul.f32 %v690, %v680
        %699 = vrot.lane.b32.xlu0 %v691, 127
        %v700 = vpop.permute.xlu0 %699
        %701 = vrot.lane.b32.xlu0 %v692, 127
        %v702 = vpop.permute.xlu0 %701
        %703 = vrot.lane.b32.xlu0 %v693, 127
        %v704 = vpop.permute.xlu0 %703
        %705 = vrot.lane.b32.xlu0 %v694, 127
        %v706 = vpop.permute.xlu0 %705
        %v711 = vadd.f32 %v686, %v700
        %v712 = vadd.f32 %v687, %v702
        %v713 = vadd.f32 %v688, %v704
        %v714 = vadd.f32 %v689, %v706
        %v715 = vstv %s268
        %v716 = vmul.f32 %v715, %v677
        %v717 = vmul.f32 %v715, %v678
        %v718 = vmul.f32 %v715, %v679
        %v719 = vmul.f32 %v715, %v680
        %724 = vrot.lane.b32.xlu0 %v716, 126
        %v725 = vpop.permute.xlu0 %724
        %726 = vrot.lane.b32.xlu0 %v717, 126
        %v727 = vpop.permute.xlu0 %726
        %728 = vrot.lane.b32.xlu0 %v718, 126
        %v729 = vpop.permute.xlu0 %728
        %730 = vrot.lane.b32.xlu0 %v719, 126
        %v731 = vpop.permute.xlu0 %730
        %v736 = vadd.f32 %v711, %v725
        %v737 = vadd.f32 %v712, %v727
        %v738 = vadd.f32 %v713, %v729
        %v739 = vadd.f32 %v714, %v731
        %v740 = vstv %s270
        %v741 = vadd.f32 %v736, %v740
        %v742 = vadd.f32 %v737, %v740
        %v743 = vadd.f32 %v738, %v740
        %v744 = vadd.f32 %v739, %v740
        %749 = vrot.lane.b32.xlu0 %v741, 126
        %v750 = vpop.permute.xlu0 %749
        %751 = vrot.lane.b32.xlu0 %v742, 126
        %v752 = vpop.permute.xlu0 %751
        %753 = vrot.lane.b32.xlu0 %v743, 126
        %v754 = vpop.permute.xlu0 %753
        %755 = vrot.lane.b32.xlu0 %v744, 126
        %v756 = vpop.permute.xlu0 %755
        %v761 = vadd.f32 %v296, %v750
        %v762 = vadd.f32 %v297, %v752
        %v763 = vadd.f32 %v298, %v754
        %v764 = vadd.f32 %v299, %v756
        %769 = vrot.lane.b32.xlu0 %v761, 3
        %v770 = vpop.permute.xlu0 %769
        %771 = vrot.lane.b32.xlu0 %v762, 3
        %v772 = vpop.permute.xlu0 %771
        %773 = vrot.lane.b32.xlu0 %v763, 3
        %v774 = vpop.permute.xlu0 %773
        %775 = vrot.lane.b32.xlu0 %v764, 3
        %v776 = vpop.permute.xlu0 %775
        %781 = vst.msk [vmem:[#allocation2 + $0x1] sm:$0xff] %vm320, %v770
        %782 = vst.msk [vmem:[#allocation2 + $0x11] sm:$0xff] %vm320, %v772
        %783 = vst.msk [vmem:[#allocation2 + $0x21] sm:$0xff] %vm320, %v774
        %784 = vst.msk [vmem:[#allocation2 + $0x31] sm:$0xff] %vm320, %v776
        %v785 = vld [vmem:[#allocation2] sm:$0xff]
        %v786 = vld [vmem:[#allocation2 + $0x10] sm:$0xff]
        %v787 = vld [vmem:[#allocation2 + $0x20] sm:$0xff]
        %v788 = vld [vmem:[#allocation2 + $0x30] sm:$0xff]
        %v789 = vmul.f32 %v329, %v785
        %v790 = vmul.f32 %v329, %v786
        %v791 = vmul.f32 %v329, %v787
        %v792 = vmul.f32 %v329, %v788
        %v793 = vmul.f32 %v388, %v785
        %v794 = vmul.f32 %v388, %v786
        %v795 = vmul.f32 %v388, %v787
        %v796 = vmul.f32 %v388, %v788
        %801 = vrot.lane.b32.xlu0 %v793, 126
        %v802 = vpop.permute.xlu0 %801
        %803 = vrot.lane.b32.xlu0 %v794, 126
        %v804 = vpop.permute.xlu0 %803
        %805 = vrot.lane.b32.xlu0 %v795, 126
        %v806 = vpop.permute.xlu0 %805
        %807 = vrot.lane.b32.xlu0 %v796, 126
        %v808 = vpop.permute.xlu0 %807
        %v813 = vadd.f32 %v789, %v802
        %v814 = vadd.f32 %v790, %v804
        %v815 = vadd.f32 %v791, %v806
        %v816 = vadd.f32 %v792, %v808
        %v817 = vmul.f32 %v451, %v785
        %v818 = vmul.f32 %v451, %v786
        %v819 = vmul.f32 %v451, %v787
        %v820 = vmul.f32 %v451, %v788
        %825 = vrot.lane.b32.xlu0 %v817, 124
        %v826 = vpop.permute.xlu0 %825
        %827 = vrot.lane.b32.xlu0 %v818, 124
        %v828 = vpop.permute.xlu0 %827
        %829 = vrot.lane.b32.xlu0 %v819, 124
        %v830 = vpop.permute.xlu0 %829
        %831 = vrot.lane.b32.xlu0 %v820, 124
        %v832 = vpop.permute.xlu0 %831
        %v837 = vadd.f32 %v813, %v826
        %v838 = vadd.f32 %v814, %v828
        %v839 = vadd.f32 %v815, %v830
        %v840 = vadd.f32 %v816, %v832
        %v841 = vld [vmem:[#allocation2 + $0x1] sm:$0xff]
        %v842 = vld [vmem:[#allocation2 + $0x11] sm:$0xff]
        %v843 = vld [vmem:[#allocation2 + $0x21] sm:$0xff]
        %v844 = vld [vmem:[#allocation2 + $0x31] sm:$0xff]
        %v845 = vmul.f32 %v334, %v841
        %v846 = vmul.f32 %v334, %v842
        %v847 = vmul.f32 %v334, %v843
        %v848 = vmul.f32 %v334, %v844
        %v849 = vadd.f32 %v837, %v845
        %v850 = vadd.f32 %v838, %v846
        %v851 = vadd.f32 %v839, %v847
        %v852 = vadd.f32 %v840, %v848
        %v853 = vmul.f32 %v397, %v841
        %v854 = vmul.f32 %v397, %v842
        %v855 = vmul.f32 %v397, %v843
        %v856 = vmul.f32 %v397, %v844
        %861 = vrot.lane.b32.xlu0 %v853, 126
        %v862 = vpop.permute.xlu0 %861
        %863 = vrot.lane.b32.xlu0 %v854, 126
        %v864 = vpop.permute.xlu0 %863
        %865 = vrot.lane.b32.xlu0 %v855, 126
        %v866 = vpop.permute.xlu0 %865
        %867 = vrot.lane.b32.xlu0 %v856, 126
        %v868 = vpop.permute.xlu0 %867
        %v873 = vadd.f32 %v849, %v862
        %v874 = vadd.f32 %v850, %v864
        %v875 = vadd.f32 %v851, %v866
        %v876 = vadd.f32 %v852, %v868
        %v877 = vmul.f32 %v460, %v841
        %v878 = vmul.f32 %v460, %v842
        %v879 = vmul.f32 %v460, %v843
        %v880 = vmul.f32 %v460, %v844
        %885 = vrot.lane.b32.xlu0 %v877, 124
        %v886 = vpop.permute.xlu0 %885
        %887 = vrot.lane.b32.xlu0 %v878, 124
        %v888 = vpop.permute.xlu0 %887
        %889 = vrot.lane.b32.xlu0 %v879, 124
        %v890 = vpop.permute.xlu0 %889
        %891 = vrot.lane.b32.xlu0 %v880, 124
        %v892 = vpop.permute.xlu0 %891
        %v897 = vadd.f32 %v873, %v886
        %v898 = vadd.f32 %v874, %v888
        %v899 = vadd.f32 %v875, %v890
        %v900 = vadd.f32 %v876, %v892
        %v901 = vld [vmem:[#allocation2 + $0x2] sm:$0xff]
        %v902 = vld [vmem:[#allocation2 + $0x12] sm:$0xff]
        %v903 = vld [vmem:[#allocation2 + $0x22] sm:$0xff]
        %v904 = vld [vmem:[#allocation2 + $0x32] sm:$0xff]
        %v905 = vmul.f32 %v359, %v901
        %v906 = vmul.f32 %v359, %v902
        %v907 = vmul.f32 %v359, %v903
        %v908 = vmul.f32 %v359, %v904
        %v909 = vadd.f32 %v897, %v905
        %v910 = vadd.f32 %v898, %v906
        %v911 = vadd.f32 %v899, %v907
        %v912 = vadd.f32 %v900, %v908
        %v913 = vmul.f32 %v422, %v901
        %v914 = vmul.f32 %v422, %v902
        %v915 = vmul.f32 %v422, %v903
        %v916 = vmul.f32 %v422, %v904
        %921 = vrot.lane.b32.xlu0 %v913, 126
        %v922 = vpop.permute.xlu0 %921
        %923 = vrot.lane.b32.xlu0 %v914, 126
        %v924 = vpop.permute.xlu0 %923
        %925 = vrot.lane.b32.xlu0 %v915, 126
        %v926 = vpop.permute.xlu0 %925
        %927 = vrot.lane.b32.xlu0 %v916, 126
        %v928 = vpop.permute.xlu0 %927
        %v933 = vadd.f32 %v909, %v922
        %v934 = vadd.f32 %v910, %v924
        %v935 = vadd.f32 %v911, %v926
        %v936 = vadd.f32 %v912, %v928
        %v937 = vmul.f32 %v485, %v901
        %v938 = vmul.f32 %v485, %v902
        %v939 = vmul.f32 %v485, %v903
        %v940 = vmul.f32 %v485, %v904
        %945 = vrot.lane.b32.xlu0 %v937, 124
        %v946 = vpop.permute.xlu0 %945
        %947 = vrot.lane.b32.xlu0 %v938, 124
        %v948 = vpop.permute.xlu0 %947
        %949 = vrot.lane.b32.xlu0 %v939, 124
        %v950 = vpop.permute.xlu0 %949
        %951 = vrot.lane.b32.xlu0 %v940, 124
        %v952 = vpop.permute.xlu0 %951
        %v957 = vadd.f32 %v933, %v946
        %v958 = vadd.f32 %v934, %v948
        %v959 = vadd.f32 %v935, %v950
        %v960 = vadd.f32 %v936, %v952
        %v961 = vadd.f32 %v957, %v510
        %v962 = vadd.f32 %v958, %v510
        %v963 = vadd.f32 %v959, %v510
        %v964 = vadd.f32 %v960, %v510
        %v965 = vsub.f32 %v761, %v961
        %v966 = vsub.f32 %v762, %v962
        %v967 = vsub.f32 %v763, %v963
        %v968 = vsub.f32 %v764, %v964
        %973 = vrot.lane.b32.xlu0 %v965, 3
        %v974 = vpop.permute.xlu0 %973
        %975 = vrot.lane.b32.xlu0 %v966, 3
        %v976 = vpop.permute.xlu0 %975
        %977 = vrot.lane.b32.xlu0 %v967, 3
        %v978 = vpop.permute.xlu0 %977
        %979 = vrot.lane.b32.xlu0 %v968, 3
        %v980 = vpop.permute.xlu0 %979
        %985 = vst.msk [vmem:[#allocation2 + $0x1] sm:$0xff] %vm320, %v974
        %986 = vst.msk [vmem:[#allocation2 + $0x11] sm:$0xff] %vm320, %v976
        %987 = vst.msk [vmem:[#allocation2 + $0x21] sm:$0xff] %vm320, %v978
        %988 = vst.msk [vmem:[#allocation2 + $0x31] sm:$0xff] %vm320, %v980
        %v989 = vld [vmem:[#allocation2] sm:$0xff]
        %v990 = vld [vmem:[#allocation2 + $0x10] sm:$0xff]
        %v991 = vld [vmem:[#allocation2 + $0x20] sm:$0xff]
        %v992 = vld [vmem:[#allocation2 + $0x30] sm:$0xff]
        %v993 = vmul.f32 %v559, %v989
        %v994 = vmul.f32 %v559, %v990
        %v995 = vmul.f32 %v559, %v991
        %v996 = vmul.f32 %v559, %v992
        %v997 = vmul.f32 %v618, %v989
        %v998 = vmul.f32 %v618, %v990
        %v999 = vmul.f32 %v618, %v991
        %v1000 = vmul.f32 %v618, %v992
        %1005 = vrot.lane.b32.xlu0 %v997, 126
        %v1006 = vpop.permute.xlu0 %1005
        %1007 = vrot.lane.b32.xlu0 %v998, 126
        %v1008 = vpop.permute.xlu0 %1007
        %1009 = vrot.lane.b32.xlu0 %v999, 126
        %v1010 = vpop.permute.xlu0 %1009
        %1011 = vrot.lane.b32.xlu0 %v1000, 126
        %v1012 = vpop.permute.xlu0 %1011
        %v1017 = vadd.f32 %v993, %v1006
        %v1018 = vadd.f32 %v994, %v1008
        %v1019 = vadd.f32 %v995, %v1010
        %v1020 = vadd.f32 %v996, %v1012
        %v1021 = vmul.f32 %v681, %v989
        %v1022 = vmul.f32 %v681, %v990
        %v1023 = vmul.f32 %v681, %v991
        %v1024 = vmul.f32 %v681, %v992
        %1029 = vrot.lane.b32.xlu0 %v1021, 124
        %v1030 = vpop.permute.xlu0 %1029
        %1031 = vrot.lane.b32.xlu0 %v1022, 124
        %v1032 = vpop.permute.xlu0 %1031
        %1033 = vrot.lane.b32.xlu0 %v1023, 124
        %v1034 = vpop.permute.xlu0 %1033
        %1035 = vrot.lane.b32.xlu0 %v1024, 124
        %v1036 = vpop.permute.xlu0 %1035
        %v1041 = vadd.f32 %v1017, %v1030
        %v1042 = vadd.f32 %v1018, %v1032
        %v1043 = vadd.f32 %v1019, %v1034
        %v1044 = vadd.f32 %v1020, %v1036
        %v1045 = vld [vmem:[#allocation2 + $0x1] sm:$0xff]
        %v1046 = vld [vmem:[#allocation2 + $0x11] sm:$0xff]
        %v1047 = vld [vmem:[#allocation2 + $0x21] sm:$0xff]
        %v1048 = vld [vmem:[#allocation2 + $0x31] sm:$0xff]
        %v1049 = vmul.f32 %v564, %v1045
        %v1050 = vmul.f32 %v564, %v1046
        %v1051 = vmul.f32 %v564, %v1047
        %v1052 = vmul.f32 %v564, %v1048
        %v1053 = vadd.f32 %v1041, %v1049
        %v1054 = vadd.f32 %v1042, %v1050
        %v1055 = vadd.f32 %v1043, %v1051
        %v1056 = vadd.f32 %v1044, %v1052
        %v1057 = vmul.f32 %v627, %v1045
        %v1058 = vmul.f32 %v627, %v1046
        %v1059 = vmul.f32 %v627, %v1047
        %v1060 = vmul.f32 %v627, %v1048
        %1065 = vrot.lane.b32.xlu0 %v1057, 126
        %v1066 = vpop.permute.xlu0 %1065
        %1067 = vrot.lane.b32.xlu0 %v1058, 126
        %v1068 = vpop.permute.xlu0 %1067
        %1069 = vrot.lane.b32.xlu0 %v1059, 126
        %v1070 = vpop.permute.xlu0 %1069
        %1071 = vrot.lane.b32.xlu0 %v1060, 126
        %v1072 = vpop.permute.xlu0 %1071
        %v1077 = vadd.f32 %v1053, %v1066
        %v1078 = vadd.f32 %v1054, %v1068
        %v1079 = vadd.f32 %v1055, %v1070
        %v1080 = vadd.f32 %v1056, %v1072
        %v1081 = vmul.f32 %v690, %v1045
        %v1082 = vmul.f32 %v690, %v1046
        %v1083 = vmul.f32 %v690, %v1047
        %v1084 = vmul.f32 %v690, %v1048
        %1089 = vrot.lane.b32.xlu0 %v1081, 124
        %v1090 = vpop.permute.xlu0 %1089
        %1091 = vrot.lane.b32.xlu0 %v1082, 124
        %v1092 = vpop.permute.xlu0 %1091
        %1093 = vrot.lane.b32.xlu0 %v1083, 124
        %v1094 = vpop.permute.xlu0 %1093
        %1095 = vrot.lane.b32.xlu0 %v1084, 124
        %v1096 = vpop.permute.xlu0 %1095
        %v1101 = vadd.f32 %v1077, %v1090
        %v1102 = vadd.f32 %v1078, %v1092
        %v1103 = vadd.f32 %v1079, %v1094
        %v1104 = vadd.f32 %v1080, %v1096
        %v1105 = vld [vmem:[#allocation2 + $0x2] sm:$0xff]
        %v1106 = vld [vmem:[#allocation2 + $0x12] sm:$0xff]
        %v1107 = vld [vmem:[#allocation2 + $0x22] sm:$0xff]
        %v1108 = vld [vmem:[#allocation2 + $0x32] sm:$0xff]
        %v1109 = vmul.f32 %v589, %v1105
        %v1110 = vmul.f32 %v589, %v1106
        %v1111 = vmul.f32 %v589, %v1107
        %v1112 = vmul.f32 %v589, %v1108
        %v1113 = vadd.f32 %v1101, %v1109
        %v1114 = vadd.f32 %v1102, %v1110
        %v1115 = vadd.f32 %v1103, %v1111
        %v1116 = vadd.f32 %v1104, %v1112
        %v1117 = vmul.f32 %v652, %v1105
        %v1118 = vmul.f32 %v652, %v1106
        %v1119 = vmul.f32 %v652, %v1107
        %v1120 = vmul.f32 %v652, %v1108
        %1125 = vrot.lane.b32.xlu0 %v1117, 126
        %v1126 = vpop.permute.xlu0 %1125
        %1127 = vrot.lane.b32.xlu0 %v1118, 126
        %v1128 = vpop.permute.xlu0 %1127
        %1129 = vrot.lane.b32.xlu0 %v1119, 126
        %v1130 = vpop.permute.xlu0 %1129
        %1131 = vrot.lane.b32.xlu0 %v1120, 126
        %v1132 = vpop.permute.xlu0 %1131
        %v1137 = vadd.f32 %v1113, %v1126
        %v1138 = vadd.f32 %v1114, %v1128
        %v1139 = vadd.f32 %v1115, %v1130
        %v1140 = vadd.f32 %v1116, %v1132
        %v1141 = vmul.f32 %v715, %v1105
        %v1142 = vmul.f32 %v715, %v1106
        %v1143 = vmul.f32 %v715, %v1107
        %v1144 = vmul.f32 %v715, %v1108
        %1149 = vrot.lane.b32.xlu0 %v1141, 124
        %v1150 = vpop.permute.xlu0 %1149
        %1151 = vrot.lane.b32.xlu0 %v1142, 124
        %v1152 = vpop.permute.xlu0 %1151
        %1153 = vrot.lane.b32.xlu0 %v1143, 124
        %v1154 = vpop.permute.xlu0 %1153
        %1155 = vrot.lane.b32.xlu0 %v1144, 124
        %v1156 = vpop.permute.xlu0 %1155
        %v1161 = vadd.f32 %v1137, %v1150
        %v1162 = vadd.f32 %v1138, %v1152
        %v1163 = vadd.f32 %v1139, %v1154
        %v1164 = vadd.f32 %v1140, %v1156
        %v1165 = vadd.f32 %v1161, %v740
        %v1166 = vadd.f32 %v1162, %v740
        %v1167 = vadd.f32 %v1163, %v740
        %v1168 = vadd.f32 %v1164, %v740
        %1173 = vrot.lane.b32.xlu0 %v1165, 126
        %v1174 = vpop.permute.xlu0 %1173
        %1175 = vrot.lane.b32.xlu0 %v1166, 126
        %v1176 = vpop.permute.xlu0 %1175
        %1177 = vrot.lane.b32.xlu0 %v1167, 126
        %v1178 = vpop.permute.xlu0 %1177
        %1179 = vrot.lane.b32.xlu0 %v1168, 126
        %v1180 = vpop.permute.xlu0 %1179
        %v1185 = vadd.f32 %v761, %v1174
        %v1186 = vadd.f32 %v762, %v1176
        %v1187 = vadd.f32 %v763, %v1178
        %v1188 = vadd.f32 %v764, %v1180
        %v1189 = vsel %vm295, %v1185, %v965
        %v1190 = vsel %vm295, %v1186, %v966
        %v1191 = vsel %vm295, %v1187, %v967
        %v1192 = vsel %vm295, %v1188, %v968
        %vm1193 = vcmask 130048
        %1194 = vst.msk [vmem:[%s243] sm:$0xff] %vm1193, %v1189
        %1195 = vst.msk [vmem:[%s243 + $0x8] sm:$0xff] %vm1193, %v1190
        %1196 = vst.msk [vmem:[%s243 + $0x10] sm:$0xff] %vm1193, %v1191
        %1197 = vst.msk [vmem:[%s243 + $0x18] sm:$0xff] %vm1193, %v1192
        %1198 = vst.msk [vmem:[#allocation2 + $0x1] sm:$0xff] %vm320, %v540
        %1199 = vst.msk [vmem:[#allocation2 + $0x11] sm:$0xff] %vm320, %v542
        %1200 = vst.msk [vmem:[#allocation2 + $0x21] sm:$0xff] %vm320, %v544
        %1201 = vst.msk [vmem:[#allocation2 + $0x31] sm:$0xff] %vm320, %v546
        %v1202 = vld [vmem:[#allocation2] sm:$0xff]
        %v1203 = vld [vmem:[#allocation2 + $0x10] sm:$0xff]
        %v1204 = vld [vmem:[#allocation2 + $0x20] sm:$0xff]
        %v1205 = vld [vmem:[#allocation2 + $0x30] sm:$0xff]
        %v1206 = vmul.f32 %v329, %v1202
        %v1207 = vmul.f32 %v329, %v1203
        %v1208 = vmul.f32 %v329, %v1204
        %v1209 = vmul.f32 %v329, %v1205
        %v1210 = vmul.f32 %v388, %v1202
        %v1211 = vmul.f32 %v388, %v1203
        %v1212 = vmul.f32 %v388, %v1204
        %v1213 = vmul.f32 %v388, %v1205
        %1218 = vrot.lane.b32.xlu0 %v1210, 126
        %v1219 = vpop.permute.xlu0 %1218
        %1220 = vrot.lane.b32.xlu0 %v1211, 126
        %v1221 = vpop.permute.xlu0 %1220
        %1222 = vrot.lane.b32.xlu0 %v1212, 126
        %v1223 = vpop.permute.xlu0 %1222
        %1224 = vrot.lane.b32.xlu0 %v1213, 126
        %v1225 = vpop.permute.xlu0 %1224
        %v1230 = vadd.f32 %v1206, %v1219
        %v1231 = vadd.f32 %v1207, %v1221
        %v1232 = vadd.f32 %v1208, %v1223
        %v1233 = vadd.f32 %v1209, %v1225
        %v1234 = vmul.f32 %v451, %v1202
        %v1235 = vmul.f32 %v451, %v1203
        %v1236 = vmul.f32 %v451, %v1204
        %v1237 = vmul.f32 %v451, %v1205
        %1242 = vrot.lane.b32.xlu0 %v1234, 124
        %v1243 = vpop.permute.xlu0 %1242
        %1244 = vrot.lane.b32.xlu0 %v1235, 124
        %v1245 = vpop.permute.xlu0 %1244
        %1246 = vrot.lane.b32.xlu0 %v1236, 124
        %v1247 = vpop.permute.xlu0 %1246
        %1248 = vrot.lane.b32.xlu0 %v1237, 124
        %v1249 = vpop.permute.xlu0 %1248
        %v1254 = vadd.f32 %v1230, %v1243
        %v1255 = vadd.f32 %v1231, %v1245
        %v1256 = vadd.f32 %v1232, %v1247
        %v1257 = vadd.f32 %v1233, %v1249
        %v1258 = vld [vmem:[#allocation2 + $0x1] sm:$0xff]
        %v1259 = vld [vmem:[#allocation2 + $0x11] sm:$0xff]
        %v1260 = vld [vmem:[#allocation2 + $0x21] sm:$0xff]
        %v1261 = vld [vmem:[#allocation2 + $0x31] sm:$0xff]
        %v1262 = vmul.f32 %v334, %v1258
        %v1263 = vmul.f32 %v334, %v1259
        %v1264 = vmul.f32 %v334, %v1260
        %v1265 = vmul.f32 %v334, %v1261
        %v1266 = vadd.f32 %v1254, %v1262
        %v1267 = vadd.f32 %v1255, %v1263
        %v1268 = vadd.f32 %v1256, %v1264
        %v1269 = vadd.f32 %v1257, %v1265
        %v1270 = vmul.f32 %v397, %v1258
        %v1271 = vmul.f32 %v397, %v1259
        %v1272 = vmul.f32 %v397, %v1260
        %v1273 = vmul.f32 %v397, %v1261
        %1278 = vrot.lane.b32.xlu0 %v1270, 126
        %v1279 = vpop.permute.xlu0 %1278
        %1280 = vrot.lane.b32.xlu0 %v1271, 126
        %v1281 = vpop.permute.xlu0 %1280
        %1282 = vrot.lane.b32.xlu0 %v1272, 126
        %v1283 = vpop.permute.xlu0 %1282
        %1284 = vrot.lane.b32.xlu0 %v1273, 126
        %v1285 = vpop.permute.xlu0 %1284
        %v1290 = vadd.f32 %v1266, %v1279
        %v1291 = vadd.f32 %v1267, %v1281
        %v1292 = vadd.f32 %v1268, %v1283
        %v1293 = vadd.f32 %v1269, %v1285
        %v1294 = vmul.f32 %v460, %v1258
        %v1295 = vmul.f32 %v460, %v1259
        %v1296 = vmul.f32 %v460, %v1260
        %v1297 = vmul.f32 %v460, %v1261
        %1302 = vrot.lane.b32.xlu0 %v1294, 124
        %v1303 = vpop.permute.xlu0 %1302
        %1304 = vrot.lane.b32.xlu0 %v1295, 124
        %v1305 = vpop.permute.xlu0 %1304
        %1306 = vrot.lane.b32.xlu0 %v1296, 124
        %v1307 = vpop.permute.xlu0 %1306
        %1308 = vrot.lane.b32.xlu0 %v1297, 124
        %v1309 = vpop.permute.xlu0 %1308
        %v1314 = vadd.f32 %v1290, %v1303
        %v1315 = vadd.f32 %v1291, %v1305
        %v1316 = vadd.f32 %v1292, %v1307
        %v1317 = vadd.f32 %v1293, %v1309
        %v1318 = vld [vmem:[#allocation2 + $0x2] sm:$0xff]
        %v1319 = vld [vmem:[#allocation2 + $0x12] sm:$0xff]
        %v1320 = vld [vmem:[#allocation2 + $0x22] sm:$0xff]
        %v1321 = vld [vmem:[#allocation2 + $0x32] sm:$0xff]
        %v1322 = vmul.f32 %v359, %v1318
        %v1323 = vmul.f32 %v359, %v1319
        %v1324 = vmul.f32 %v359, %v1320
        %v1325 = vmul.f32 %v359, %v1321
        %v1326 = vadd.f32 %v1314, %v1322
        %v1327 = vadd.f32 %v1315, %v1323
        %v1328 = vadd.f32 %v1316, %v1324
        %v1329 = vadd.f32 %v1317, %v1325
        %v1330 = vmul.f32 %v422, %v1318
        %v1331 = vmul.f32 %v422, %v1319
        %v1332 = vmul.f32 %v422, %v1320
        %v1333 = vmul.f32 %v422, %v1321
        %1338 = vrot.lane.b32.xlu0 %v1330, 126
        %v1339 = vpop.permute.xlu0 %1338
        %1340 = vrot.lane.b32.xlu0 %v1331, 126
        %v1341 = vpop.permute.xlu0 %1340
        %1342 = vrot.lane.b32.xlu0 %v1332, 126
        %v1343 = vpop.permute.xlu0 %1342
        %1344 = vrot.lane.b32.xlu0 %v1333, 126
        %v1345 = vpop.permute.xlu0 %1344
        %v1350 = vadd.f32 %v1326, %v1339
        %v1351 = vadd.f32 %v1327, %v1341
        %v1352 = vadd.f32 %v1328, %v1343
        %v1353 = vadd.f32 %v1329, %v1345
        %v1354 = vmul.f32 %v485, %v1318
        %v1355 = vmul.f32 %v485, %v1319
        %v1356 = vmul.f32 %v485, %v1320
        %v1357 = vmul.f32 %v485, %v1321
        %1362 = vrot.lane.b32.xlu0 %v1354, 124
        %v1363 = vpop.permute.xlu0 %1362
        %1364 = vrot.lane.b32.xlu0 %v1355, 124
        %v1365 = vpop.permute.xlu0 %1364
        %1366 = vrot.lane.b32.xlu0 %v1356, 124
        %v1367 = vpop.permute.xlu0 %1366
        %1368 = vrot.lane.b32.xlu0 %v1357, 124
        %v1369 = vpop.permute.xlu0 %1368
        %v1374 = vadd.f32 %v1350, %v1363
        %v1375 = vadd.f32 %v1351, %v1365
        %v1376 = vadd.f32 %v1352, %v1367
        %v1377 = vadd.f32 %v1353, %v1369
        %v1378 = vadd.f32 %v1374, %v510
        %v1379 = vadd.f32 %v1375, %v510
        %v1380 = vadd.f32 %v1376, %v510
        %v1381 = vadd.f32 %v1377, %v510
        %v1382 = vsub.f32 %v531, %v1378
        %v1383 = vsub.f32 %v532, %v1379
        %v1384 = vsub.f32 %v533, %v1380
        %v1385 = vsub.f32 %v534, %v1381
        %1390 = vrot.lane.b32.xlu0 %v1382, 3
        %v1391 = vpop.permute.xlu0 %1390
        %1392 = vrot.lane.b32.xlu0 %v1383, 3
        %v1393 = vpop.permute.xlu0 %1392
        %1394 = vrot.lane.b32.xlu0 %v1384, 3
        %v1395 = vpop.permute.xlu0 %1394
        %1396 = vrot.lane.b32.xlu0 %v1385, 3
        %v1397 = vpop.permute.xlu0 %1396
        %1402 = vst.msk [vmem:[#allocation2 + $0x1] sm:$0xff] %vm320, %v1391
        %1403 = vst.msk [vmem:[#allocation2 + $0x11] sm:$0xff] %vm320, %v1393
        %1404 = vst.msk [vmem:[#allocation2 + $0x21] sm:$0xff] %vm320, %v1395
        %1405 = vst.msk [vmem:[#allocation2 + $0x31] sm:$0xff] %vm320, %v1397
        %v1406 = vld [vmem:[#allocation2] sm:$0xff]
        %v1407 = vld [vmem:[#allocation2 + $0x10] sm:$0xff]
        %v1408 = vld [vmem:[#allocation2 + $0x20] sm:$0xff]
        %v1409 = vld [vmem:[#allocation2 + $0x30] sm:$0xff]
        %v1410 = vmul.f32 %v559, %v1406
        %v1411 = vmul.f32 %v559, %v1407
        %v1412 = vmul.f32 %v559, %v1408
        %v1413 = vmul.f32 %v559, %v1409
        %v1414 = vmul.f32 %v618, %v1406
        %v1415 = vmul.f32 %v618, %v1407
        %v1416 = vmul.f32 %v618, %v1408
        %v1417 = vmul.f32 %v618, %v1409
        %1422 = vrot.lane.b32.xlu0 %v1414, 126
        %v1423 = vpop.permute.xlu0 %1422
        %1424 = vrot.lane.b32.xlu0 %v1415, 126
        %v1425 = vpop.permute.xlu0 %1424
        %1426 = vrot.lane.b32.xlu0 %v1416, 126
        %v1427 = vpop.permute.xlu0 %1426
        %1428 = vrot.lane.b32.xlu0 %v1417, 126
        %v1429 = vpop.permute.xlu0 %1428
        %v1434 = vadd.f32 %v1410, %v1423
        %v1435 = vadd.f32 %v1411, %v1425
        %v1436 = vadd.f32 %v1412, %v1427
        %v1437 = vadd.f32 %v1413, %v1429
        %v1438 = vmul.f32 %v681, %v1406
        %v1439 = vmul.f32 %v681, %v1407
        %v1440 = vmul.f32 %v681, %v1408
        %v1441 = vmul.f32 %v681, %v1409
        %1446 = vrot.lane.b32.xlu0 %v1438, 124
        %v1447 = vpop.permute.xlu0 %1446
        %1448 = vrot.lane.b32.xlu0 %v1439, 124
        %v1449 = vpop.permute.xlu0 %1448
        %1450 = vrot.lane.b32.xlu0 %v1440, 124
        %v1451 = vpop.permute.xlu0 %1450
        %1452 = vrot.lane.b32.xlu0 %v1441, 124
        %v1453 = vpop.permute.xlu0 %1452
        %v1458 = vadd.f32 %v1434, %v1447
        %v1459 = vadd.f32 %v1435, %v1449
        %v1460 = vadd.f32 %v1436, %v1451
        %v1461 = vadd.f32 %v1437, %v1453
        %v1462 = vld [vmem:[#allocation2 + $0x1] sm:$0xff]
        %v1463 = vld [vmem:[#allocation2 + $0x11] sm:$0xff]
        %v1464 = vld [vmem:[#allocation2 + $0x21] sm:$0xff]
        %v1465 = vld [vmem:[#allocation2 + $0x31] sm:$0xff]
        %v1466 = vmul.f32 %v564, %v1462
        %v1467 = vmul.f32 %v564, %v1463
        %v1468 = vmul.f32 %v564, %v1464
        %v1469 = vmul.f32 %v564, %v1465
        %v1470 = vadd.f32 %v1458, %v1466
        %v1471 = vadd.f32 %v1459, %v1467
        %v1472 = vadd.f32 %v1460, %v1468
        %v1473 = vadd.f32 %v1461, %v1469
        %v1474 = vmul.f32 %v627, %v1462
        %v1475 = vmul.f32 %v627, %v1463
        %v1476 = vmul.f32 %v627, %v1464
        %v1477 = vmul.f32 %v627, %v1465
        %1482 = vrot.lane.b32.xlu0 %v1474, 126
        %v1483 = vpop.permute.xlu0 %1482
        %1484 = vrot.lane.b32.xlu0 %v1475, 126
        %v1485 = vpop.permute.xlu0 %1484
        %1486 = vrot.lane.b32.xlu0 %v1476, 126
        %v1487 = vpop.permute.xlu0 %1486
        %1488 = vrot.lane.b32.xlu0 %v1477, 126
        %v1489 = vpop.permute.xlu0 %1488
        %v1494 = vadd.f32 %v1470, %v1483
        %v1495 = vadd.f32 %v1471, %v1485
        %v1496 = vadd.f32 %v1472, %v1487
        %v1497 = vadd.f32 %v1473, %v1489
        %v1498 = vmul.f32 %v690, %v1462
        %v1499 = vmul.f32 %v690, %v1463
        %v1500 = vmul.f32 %v690, %v1464
        %v1501 = vmul.f32 %v690, %v1465
        %1506 = vrot.lane.b32.xlu0 %v1498, 124
        %v1507 = vpop.permute.xlu0 %1506
        %1508 = vrot.lane.b32.xlu0 %v1499, 124
        %v1509 = vpop.permute.xlu0 %1508
        %1510 = vrot.lane.b32.xlu0 %v1500, 124
        %v1511 = vpop.permute.xlu0 %1510
        %1512 = vrot.lane.b32.xlu0 %v1501, 124
        %v1513 = vpop.permute.xlu0 %1512
        %v1518 = vadd.f32 %v1494, %v1507
        %v1519 = vadd.f32 %v1495, %v1509
        %v1520 = vadd.f32 %v1496, %v1511
        %v1521 = vadd.f32 %v1497, %v1513
        %v1522 = vld [vmem:[#allocation2 + $0x2] sm:$0xff]
        %v1523 = vld [vmem:[#allocation2 + $0x12] sm:$0xff]
        %v1524 = vld [vmem:[#allocation2 + $0x22] sm:$0xff]
        %v1525 = vld [vmem:[#allocation2 + $0x32] sm:$0xff]
        %v1526 = vmul.f32 %v589, %v1522
        %v1527 = vmul.f32 %v589, %v1523
        %v1528 = vmul.f32 %v589, %v1524
        %v1529 = vmul.f32 %v589, %v1525
        %v1530 = vadd.f32 %v1518, %v1526
        %v1531 = vadd.f32 %v1519, %v1527
        %v1532 = vadd.f32 %v1520, %v1528
        %v1533 = vadd.f32 %v1521, %v1529
        %v1534 = vmul.f32 %v652, %v1522
        %v1535 = vmul.f32 %v652, %v1523
        %v1536 = vmul.f32 %v652, %v1524
        %v1537 = vmul.f32 %v652, %v1525
        %1542 = vrot.lane.b32.xlu0 %v1534, 126
        %v1543 = vpop.permute.xlu0 %1542
        %1544 = vrot.lane.b32.xlu0 %v1535, 126
        %v1545 = vpop.permute.xlu0 %1544
        %1546 = vrot.lane.b32.xlu0 %v1536, 126
        %v1547 = vpop.permute.xlu0 %1546
        %1548 = vrot.lane.b32.xlu0 %v1537, 126
        %v1549 = vpop.permute.xlu0 %1548
        %v1554 = vadd.f32 %v1530, %v1543
        %v1555 = vadd.f32 %v1531, %v1545
        %v1556 = vadd.f32 %v1532, %v1547
        %v1557 = vadd.f32 %v1533, %v1549
        %v1558 = vmul.f32 %v715, %v1522
        %v1559 = vmul.f32 %v715, %v1523
        %v1560 = vmul.f32 %v715, %v1524
        %v1561 = vmul.f32 %v715, %v1525
        %1566 = vrot.lane.b32.xlu0 %v1558, 124
        %v1567 = vpop.permute.xlu0 %1566
        %1568 = vrot.lane.b32.xlu0 %v1559, 124
        %v1569 = vpop.permute.xlu0 %1568
        %1570 = vrot.lane.b32.xlu0 %v1560, 124
        %v1571 = vpop.permute.xlu0 %1570
        %1572 = vrot.lane.b32.xlu0 %v1561, 124
        %v1573 = vpop.permute.xlu0 %1572
        %v1578 = vadd.f32 %v1554, %v1567
        %v1579 = vadd.f32 %v1555, %v1569
        %v1580 = vadd.f32 %v1556, %v1571
        %v1581 = vadd.f32 %v1557, %v1573
        %v1582 = vadd.f32 %v1578, %v740
        %v1583 = vadd.f32 %v1579, %v740
        %v1584 = vadd.f32 %v1580, %v740
        %v1585 = vadd.f32 %v1581, %v740
        %1590 = vrot.lane.b32.xlu0 %v1582, 126
        %v1591 = vpop.permute.xlu0 %1590
        %1592 = vrot.lane.b32.xlu0 %v1583, 126
        %v1593 = vpop.permute.xlu0 %1592
        %1594 = vrot.lane.b32.xlu0 %v1584, 126
        %v1595 = vpop.permute.xlu0 %1594
        %1596 = vrot.lane.b32.xlu0 %v1585, 126
        %v1597 = vpop.permute.xlu0 %1596
        %v1602 = vadd.f32 %v531, %v1591
        %v1603 = vadd.f32 %v532, %v1593
        %v1604 = vadd.f32 %v533, %v1595
        %v1605 = vadd.f32 %v534, %v1597
        %v1606 = vsel %vm295, %v1602, %v1382
        %v1607 = vsel %vm295, %v1603, %v1383
        %v1608 = vsel %vm295, %v1604, %v1384
        %v1609 = vsel %vm295, %v1605, %v1385
        %1610 = vst.msk [vmem:[%s249] sm:$0xff] %vm1193, %v1606
        %1611 = vst.msk [vmem:[%s249 + $0x8] sm:$0xff] %vm1193, %v1607
        %1612 = vst.msk [vmem:[%s249 + $0x10] sm:$0xff] %vm1193, %v1608
        %1613 = vst.msk [vmem:[%s249 + $0x18] sm:$0xff] %vm1193, %v1609
        %s1614 = smul.u32 4, %s17
        %p1615 = scmp.lt.s32.totalorder %s1614, 7
        %s1616 = scalar_select %p1615, %s1614, 7
        %s1617 = smul.addr %s1616, 8
        %s1618 = scalar_lea.vmem %s3, %s1617
        %s1619 = smul.u32 4, %s17
        %p1620 = scmp.lt.s32.totalorder %s1619, 7
        %s1621 = scalar_select %p1620, %s1619, 7
        %s1622 = smul.addr %s1621, 8
        %s1623 = scalar_lea.vmem %s4, %s1622
        // Predicated region
        $region37: #{learn_wavelet_forward.1} parent=31 // pred_check
          %p1624 = pneg %p108
        $region38: #{learn_wavelet_forward.1} parent=31 // pred_check_branch
          %1626 = sbr.rel (%p1624) target = $region40
        $region39: #{learn_wavelet_forward.1} parent=31 // pred_region
          %s1627 = smul.u32 4, %s17
        $region40: #{learn_wavelet_forward.1} parent=31 // pred_fallthru
          _
        // Predicated region
        $region41: #{learn_wavelet_forward.1} parent=31 // pred_check
          %p1628 = pneg %p134
        $region42: #{learn_wavelet_forward.1} parent=31 // pred_check_branch
          %1630 = sbr.rel (%p1628) target = $region44
        $region43: #{learn_wavelet_forward.1} parent=31 // pred_region
          %s1631 = smul.u32 4, %s17
        $region44: #{learn_wavelet_forward.1} parent=31 // pred_fallthru
          _
      $region32: #{learn_wavelet_forward.1} parent=5 // pred_fallthru
        _
      %p1632 = scmp.le.s32.totalorder 2, %s12
      // Predicated region
      $region45: #{learn_wavelet_forward.1} parent=5 // pred_check
        %p1633 = pneg %p1632
      $region46: #{learn_wavelet_forward.1} parent=5 // pred_check_branch
        %1635 = sbr.rel (%p1633) target = $region48
      $region47: #{learn_wavelet_forward.1} parent=5 // pred_region
        %s1636 = ssub.s32 %s12, 2
        // Predicated region
        $region49: #{learn_wavelet_forward.1} parent=47 // pred_check
          %p1637 = pneg %p114
        $region50: #{learn_wavelet_forward.1} parent=47 // pred_check_branch
          %1639 = sbr.rel (%p1637) target = $region52
        $region51: #{learn_wavelet_forward.1} parent=47 // pred_region
          %s1640 = smul.u32 4, %s18
          %p1641 = scmp.lt.s32.totalorder %s1640, 7
          %s1642 = scalar_select %p1641, %s1640, 7
          %s1643 = smul.addr %s1642, 8
          %s1644 = scalar_lea.vmem %s3, %s1643
        $region52: #{learn_wavelet_forward.1} parent=47 // pred_fallthru
          _
        // Predicated region
        $region53: #{learn_wavelet_forward.1} parent=47 // pred_check
          %p1645 = pneg %p140
        $region54: #{learn_wavelet_forward.1} parent=47 // pred_check_branch
          %1647 = sbr.rel (%p1645) target = $region56
        $region55: #{learn_wavelet_forward.1} parent=47 // pred_region
          %s1648 = smul.u32 4, %s18
          %p1649 = scmp.lt.s32.totalorder %s1648, 7
          %s1650 = scalar_select %p1649, %s1648, 7
          %s1651 = smul.addr %s1650, 8
          %s1652 = scalar_lea.vmem %s4, %s1651
        $region56: #{learn_wavelet_forward.1} parent=47 // pred_fallthru
          _
      $region48: #{learn_wavelet_forward.1} parent=5 // pred_fallthru
        _
    $region6: #{learn_wavelet_forward.1} parent=1 // loop_footer
      %s16 = sadd.s32 1, %s12
    $region7: #{learn_wavelet_forward.1} parent=1 // loop_footer_branch
      %11 = sbr.rel target = $region3
    $region8: #{learn_wavelet_forward.1} parent=1 // loop_exit
      _
    %1653 = vsyncpa [#allocation4], 1
    %s1654 = scalar_lea.sflag [#allocation4], 1
    %1655 = vsyncpa %s1654, 1

</llo_original>
